<compile_context>
chip_gen: v7x
topology: tpu7x:2x2x1
jax: 0.10.0
libtpu: 0.0.40
codegen_flags: <defaults>
</compile_context>

<pallas_src>
import jax
import jax.numpy as jnp
from jax.experimental import pallas as pl
from jax.experimental.pallas import tpu as pltpu

LANE = 128
BF16 = jnp.bfloat16
NEG_BIG = 1e30


def _round_up(v, m):
    return ((v + m - 1) // m) * m


def _pad2(a, rows, cols, dtype=jnp.float32):
    r, c = a.shape
    return jnp.pad(a, ((0, rows - r), (0, cols - c))).astype(dtype)


def _bdot(a, b):
    # MXU matmul: bf16 operands (single-pass MXU on v5e/v6e/v7x), f32 accum.
    return jnp.dot(a.astype(BF16), b.astype(BF16),
                   preferred_element_type=jnp.float32)


# ---------------------------------------------------------------------------
# Fused kernel: GINConv x2 -> BatchNorm1d -> [gmp ; gap] -> fc1 -> ReLU -> fc2
# ---------------------------------------------------------------------------
def _fused_gin_kernel(eps_ref, adj_ref, x_ref,
                      w11_ref, b11_ref, w12_ref, b12_ref,
                      w21_ref, b21_ref, w22_ref, b22_ref,
                      gamma_ref, beta_ref, mask_ref, maskt_ref,
                      fc1wt_ref, fc1wb_ref, fc1b_ref,
                      fc2w_ref, fc2b_ref, out_ref):
    adj = adj_ref[...]                                   # (N, N)  bf16
    x = x_ref[...]                                       # (N, Fp) f32
    one_eps = 1.0 + eps_ref[0]
    n_nodes = x_ref.shape[0]
    inv_n = 1.0 / n_nodes

    # ---- GIN layer 1: MLP((1+eps)*x + adj @ x), ReLU between layers ----
    h = one_eps * x + _bdot(adj, x)
    h = jnp.maximum(_bdot(h, w11_ref[...]) + b11_ref[...], 0.0)
    h = jnp.maximum(_bdot(h, w12_ref[...]) + b12_ref[...], 0.0)

    # ---- GIN layer 2 (no ReLU on the final MLP output) ----
    h = one_eps * h + _bdot(adj, h)
    h = jnp.maximum(_bdot(h, w21_ref[...]) + b21_ref[...], 0.0)
    h = _bdot(h, w22_ref[...]) + b22_ref[...]

    # ---- BatchNorm1d: one-pass batch statistics (biased variance), f32 ----
    s1 = jnp.sum(h, axis=0, keepdims=True)               # (1, Hp)
    s2 = jnp.sum(h * h, axis=0, keepdims=True)           # (1, Hp)
    mu = s1 * inv_n
    var = jnp.maximum(s2 * inv_n - mu * mu, 0.0)
    xb = (h - mu) * jax.lax.rsqrt(var + 1e-5) * gamma_ref[...] + beta_ref[...]

    # ---- pooling ----
    mask = mask_ref[...]                                 # (G, N) f32 one-hot
    counts = jnp.sum(mask, axis=1, keepdims=True)        # (G, 1)
    nonempty = counts > 0.0
    safe_counts = jnp.maximum(counts, 1.0)

    # global mean pool as a bf16 MXU matmul (segment sum) / counts.
    mean_pool = _bdot(mask, xb) / safe_counts            # (G, Hp)

    # global max pool: per-graph (N,1) additive -BIG column bias derived from
    # the transposed mask, one sublane max each -- no (G,N,Hp) intermediate.
    bias_all = (maskt_ref[...] - 1.0) * NEG_BIG          # (N, G)
    rows = []
    for g in range(mask_ref.shape[0]):
        rows.append(jnp.max(xb + bias_all[:, g:g + 1], axis=0, keepdims=True))
    max_pool = jnp.concatenate(rows, axis=0)             # (G, Hp)

    # empty-graph guards.
    max_pool = jnp.where(nonempty, max_pool, 0.0)
    mean_pool = jnp.where(nonempty, mean_pool, 0.0)

    # ---- fc head; fc1 split avoids the lane-axis concat of [gmp, gap] ----
    hg = jnp.maximum(_bdot(max_pool, fc1wt_ref[...])
                     + _bdot(mean_pool, fc1wb_ref[...]) + fc1b_ref[...], 0.0)
    out = _bdot(hg, fc2w_ref[...]) + fc2b_ref[...]
    out_ref[...] = out.astype(out_ref.dtype)


# ---------------------------------------------------------------------------
# Wrapper: pad to lane-dense shapes, bf16 matmul operands, one pallas_call.
# ---------------------------------------------------------------------------
def model_forward(params, x, adj, mask, *, num_graphs):
    n, f = x.shape
    hidden = params["g1_w2"].shape[1]
    out_ch = params["fc2_w"].shape[1]

    fp = _round_up(f, LANE)
    hp = _round_up(hidden, LANE)
    op = _round_up(out_ch, LANE)

    # bf16 matmul operands stored in HBM; biases / BN params stay f32.
    adj_b = adj.astype(BF16)
    x_p = _pad2(x, n, fp)                                 # f32 (elementwise term)
    w11 = _pad2(params["g1_w1"], fp, hp, BF16)
    b11 = _pad2(params["g1_b1"], 1, hp)
    w12 = _pad2(params["g1_w2"], hp, hp, BF16)
    b12 = _pad2(params["g1_b2"], 1, hp)
    w21 = _pad2(params["g2_w1"], hp, hp, BF16)
    b21 = _pad2(params["g2_b1"], 1, hp)
    w22 = _pad2(params["g2_w2"], hp, hp, BF16)
    b22 = _pad2(params["g2_b2"], 1, hp)
    gamma = _pad2(params["bn_gamma"], 1, hp)
    beta = _pad2(params["bn_beta"], 1, hp)
    # fc1 (2H -> H): split rows into the gmp half and the gap half.
    fc1wt = _pad2(params["fc1_w"][:hidden], hp, hp, BF16)
    fc1wb = _pad2(params["fc1_w"][hidden:], hp, hp, BF16)
    fc1b = _pad2(params["fc1_b"], 1, hp)
    fc2w = _pad2(params["fc2_w"], hp, op, BF16)
    fc2b = _pad2(params["fc2_b"], 1, op)

    mask_f = mask.astype(jnp.float32)                     # (G, N) for counts + segment-sum
    mask_t = mask_f.T                                     # (N, G) for per-graph max bias

    vmem = pl.BlockSpec(memory_space=pltpu.MemorySpace.VMEM)
    smem = pl.BlockSpec(memory_space=pltpu.MemorySpace.SMEM)

    operands = (params["eps"], adj_b, x_p,
                w11, b11, w12, b12, w21, b21, w22, b22,
                gamma, beta, mask_f, mask_t,
                fc1wt, fc1wb, fc1b, fc2w, fc2b)

    flops = int(2 * n * n * (fp + hp)                     # two adj aggregations
                + 2 * n * (fp * hp + 3 * hp * hp)         # GIN MLPs
                + 2 * num_graphs * (n * hp + 2 * hp * hp + hp * op))
    bytes_accessed = int(sum(int(a.size) * a.dtype.itemsize for a in operands)
                         + num_graphs * op * 4)

    out_p = pl.pallas_call(
        _fused_gin_kernel,
        out_shape=jax.ShapeDtypeStruct((num_graphs, op), jnp.float32),
        in_specs=[smem] + [vmem] * 19,
        out_specs=vmem,
        compiler_params=pltpu.CompilerParams(
            vmem_limit_bytes=32 * 1024 * 1024),
        cost_estimate=pl.CostEstimate(flops=flops,
                                      transcendentals=int(hp),
                                      bytes_accessed=bytes_accessed),
    )(*operands)
    return out_p[:, :out_ch]


# ---------------------------------------------------------------------------
# Pure-JAX reference (unpadded, same bf16 matmul rounding) for correctness
# ---------------------------------------------------------------------------
def reference_forward(params, x, adj, mask, *, num_graphs):
    eps = params["eps"][0]

    def gin(xx, w1, b1, w2, b2, relu_out):
        h = (1.0 + eps) * xx + _bdot(adj, xx)
        h = jnp.maximum(_bdot(h, w1) + b1, 0.0)
        h = _bdot(h, w2) + b2
        return jnp.maximum(h, 0.0) if relu_out else h

    h = gin(x, params["g1_w1"], params["g1_b1"], params["g1_w2"],
            params["g1_b2"], True)
    h = gin(h, params["g2_w1"], params["g2_b1"], params["g2_w2"],
            params["g2_b2"], False)
    mu = h.mean(0, keepdims=True)
    var = ((h - mu) ** 2).mean(0, keepdims=True)
    hb = (h - mu) / jnp.sqrt(var + 1e-5) * params["bn_gamma"] + params["bn_beta"]
    counts = mask.sum(1, keepdims=True)
    gap = _bdot(mask, hb) / counts
    gmp = jnp.stack([jnp.max(jnp.where(mask[g][:, None] > 0, hb, -jnp.inf), axis=0)
                     for g in range(num_graphs)], axis=0)
    gr = jnp.concatenate([gmp, gap], axis=1)
    hh = jnp.maximum(_bdot(gr, params["fc1_w"]) + params["fc1_b"], 0.0)
    return _bdot(hh, params["fc2_w"]) + params["fc2_b"]


def init_params(key, in_channels, hidden, out_channels):
    ks = jax.random.split(key, 12)
    r = lambda k, s: (0.1 * jax.random.normal(k, s)).astype(jnp.float32)
    return {
        # GIN layer 1 MLP: in -> hidden -> hidden (weights stored (in, out)).
        "g1_w1": r(ks[0], (in_channels, hidden)), "g1_b1": r(ks[1], (1, hidden)),
        "g1_w2": r(ks[2], (hidden, hidden)),      "g1_b2": r(ks[3], (1, hidden)),
        # GIN layer 2 MLP: hidden -> hidden -> hidden.
        "g2_w1": r(ks[4], (hidden, hidden)),      "g2_b1": r(ks[5], (1, hidden)),
        "g2_w2": r(ks[6], (hidden, hidden)),      "g2_b2": r(ks[7], (1, hidden)),
        # GINConv eps (PyG default 0.0), scalar kept in SMEM.
        "eps": jnp.zeros((1,), jnp.float32),
        # BatchNorm1d affine params (training-mode batch stats, like the ref).
        "bn_gamma": 1.0 + r(ks[8], (1, hidden)),
        "bn_beta": r(ks[9], (1, hidden)),
        # fc1: 2*hidden -> hidden, fc2: hidden -> out_channels.
        "fc1_w": r(ks[10], (2 * hidden, hidden)),
        "fc1_b": jnp.zeros((1, hidden), jnp.float32),
        "fc2_w": r(ks[11], (hidden, out_channels)),
        "fc2_b": jnp.zeros((1, out_channels), jnp.float32),
    }


if __name__ == "__main__":
    key = jax.random.PRNGKey(0)
    N, E = 16, 48                       # nodes, edges
    IN_CH, HIDDEN, OUT_CH = 16, 32, 4
    NUM_GRAPHS = 2

    k_x, k_src, k_dst, k_p = jax.random.split(key, 4)
    x = jax.random.normal(k_x, (N, IN_CH), dtype=jnp.float32)
    src = jax.random.randint(k_src, (E,), 0, N)
    dst = jax.random.randint(k_dst, (E,), 0, N)
    # dense adjacency: adj[dst, src] += 1  (messages src -> dst)
    adj = jnp.zeros((N, N), jnp.float32).at[dst, src].add(1.0)

    # batch vector: first half of nodes -> graph 0, second half -> graph 1.
    batch = jnp.concatenate([jnp.zeros(N // 2, jnp.int32),
                             jnp.ones(N - N // 2, jnp.int32)])
    mask = (batch[None, :] == jnp.arange(NUM_GRAPHS)[:, None]).astype(jnp.float32)

    params = init_params(k_p, IN_CH, HIDDEN, OUT_CH)

    out = model_forward(params, x, adj, mask, num_graphs=NUM_GRAPHS)
    out = jax.block_until_ready(out)

    ref = reference_forward(params, x, adj, mask, num_graphs=NUM_GRAPHS)
    assert out.shape == (NUM_GRAPHS, OUT_CH)
    # bf16 matmul operands in both kernel and reference; loose-ish tolerance
    # covers accumulation-order and one-pass-vs-two-pass BN differences.
    assert jnp.allclose(out, ref, atol=2e-3, rtol=2e-3), (out, ref)

    print("KERNEL_OK")
</pallas_src>

<mosaic_0001>
module attributes {stable_mosaic.version = 11 : i64} {
  func.func @_fused_gin_kernel(%arg0: memref<1xf32, #tpu.memory_space<smem>>, %arg1: memref<16x16xbf16, #tpu.memory_space<vmem>>, %arg2: memref<16x128xf32, #tpu.memory_space<vmem>>, %arg3: memref<128x128xbf16, #tpu.memory_space<vmem>>, %arg4: memref<1x128xf32, #tpu.memory_space<vmem>>, %arg5: memref<128x128xbf16, #tpu.memory_space<vmem>>, %arg6: memref<1x128xf32, #tpu.memory_space<vmem>>, %arg7: memref<128x128xbf16, #tpu.memory_space<vmem>>, %arg8: memref<1x128xf32, #tpu.memory_space<vmem>>, %arg9: memref<128x128xbf16, #tpu.memory_space<vmem>>, %arg10: memref<1x128xf32, #tpu.memory_space<vmem>>, %arg11: memref<1x128xf32, #tpu.memory_space<vmem>>, %arg12: memref<1x128xf32, #tpu.memory_space<vmem>>, %arg13: memref<2x16xf32, #tpu.memory_space<vmem>>, %arg14: memref<16x2xf32, #tpu.memory_space<vmem>>, %arg15: memref<128x128xbf16, #tpu.memory_space<vmem>>, %arg16: memref<128x128xbf16, #tpu.memory_space<vmem>>, %arg17: memref<1x128xf32, #tpu.memory_space<vmem>>, %arg18: memref<128x128xbf16, #tpu.memory_space<vmem>>, %arg19: memref<1x128xf32, #tpu.memory_space<vmem>>, %arg20: memref<2x128xf32, #tpu.memory_space<vmem>>) attributes {dimension_semantics = [], scalar_prefetch = 0 : i64, scratch_operands = 0 : i64, tpu.core_type = #tpu.core_type<tc>} {
    %c0 = arith.constant 0 : index
    %c0_0 = arith.constant 0 : index
    %0 = vector.load %arg1[%c0, %c0_0] : memref<16x16xbf16, #tpu.memory_space<vmem>>, vector<16x16xbf16>
    %c0_1 = arith.constant 0 : index
    %c0_2 = arith.constant 0 : index
    %1 = vector.load %arg2[%c0_1, %c0_2] : memref<16x128xf32, #tpu.memory_space<vmem>>, vector<16x128xf32>
    %c0_3 = arith.constant 0 : index
    %2 = memref.load %arg0[%c0_3] : memref<1xf32, #tpu.memory_space<smem>>
    %cst = arith.constant 1.000000e+00 : f32
    %3 = arith.addf %cst, %2 : f32
    %4 = vector.broadcast %3 : f32 to vector<16x128xf32>
    %5 = arith.mulf %4, %1 : vector<16x128xf32>
    %6 = arith.truncf %1 : vector<16x128xf32> to vector<16x128xbf16>
    %cst_4 = arith.constant dense<0.000000e+00> : vector<16x128xf32>
    %7 = tpu.matmul %0, %6, %cst_4 {dimension_numbers = #tpu.dot_dimension_numbers<[1], [0], [0], [1], [0, 0, 1, 1], [], []>} : vector<16x16xbf16>, vector<16x128xbf16>, vector<16x128xf32> -> vector<16x128xf32>
    %8 = arith.addf %5, %7 : vector<16x128xf32>
    %c0_5 = arith.constant 0 : index
    %c0_6 = arith.constant 0 : index
    %9 = vector.load %arg3[%c0_5, %c0_6] : memref<128x128xbf16, #tpu.memory_space<vmem>>, vector<128x128xbf16>
    %10 = arith.truncf %8 : vector<16x128xf32> to vector<16x128xbf16>
    %cst_7 = arith.constant dense<0.000000e+00> : vector<16x128xf32>
    %11 = tpu.matmul %10, %9, %cst_7 {dimension_numbers = #tpu.dot_dimension_numbers<[1], [0], [0], [1], [0, 0, 1, 1], [], []>} : vector<16x128xbf16>, vector<128x128xbf16>, vector<16x128xf32> -> vector<16x128xf32>
    %c0_8 = arith.constant 0 : index
    %c0_9 = arith.constant 0 : index
    %12 = vector.load %arg4[%c0_8, %c0_9] : memref<1x128xf32, #tpu.memory_space<vmem>>, vector<1x128xf32>
    %13 = vector.broadcast %12 : vector<1x128xf32> to vector<16x128xf32>
    %14 = arith.addf %11, %13 : vector<16x128xf32>
    %cst_10 = arith.constant 0.000000e+00 : f32
    %15 = vector.broadcast %cst_10 : f32 to vector<16x128xf32>
    %16 = arith.maximumf %14, %15 : vector<16x128xf32>
    %c0_11 = arith.constant 0 : index
    %c0_12 = arith.constant 0 : index
    %17 = vector.load %arg5[%c0_11, %c0_12] : memref<128x128xbf16, #tpu.memory_space<vmem>>, vector<128x128xbf16>
    %18 = arith.truncf %16 : vector<16x128xf32> to vector<16x128xbf16>
    %cst_13 = arith.constant dense<0.000000e+00> : vector<16x128xf32>
    %19 = tpu.matmul %18, %17, %cst_13 {dimension_numbers = #tpu.dot_dimension_numbers<[1], [0], [0], [1], [0, 0, 1, 1], [], []>} : vector<16x128xbf16>, vector<128x128xbf16>, vector<16x128xf32> -> vector<16x128xf32>
    %c0_14 = arith.constant 0 : index
    %c0_15 = arith.constant 0 : index
    %20 = vector.load %arg6[%c0_14, %c0_15] : memref<1x128xf32, #tpu.memory_space<vmem>>, vector<1x128xf32>
    %21 = vector.broadcast %20 : vector<1x128xf32> to vector<16x128xf32>
    %22 = arith.addf %19, %21 : vector<16x128xf32>
    %cst_16 = arith.constant 0.000000e+00 : f32
    %23 = vector.broadcast %cst_16 : f32 to vector<16x128xf32>
    %24 = arith.maximumf %22, %23 : vector<16x128xf32>
    %25 = vector.broadcast %3 : f32 to vector<16x128xf32>
    %26 = arith.mulf %25, %24 : vector<16x128xf32>
    %27 = arith.truncf %24 : vector<16x128xf32> to vector<16x128xbf16>
    %cst_17 = arith.constant dense<0.000000e+00> : vector<16x128xf32>
    %28 = tpu.matmul %0, %27, %cst_17 {dimension_numbers = #tpu.dot_dimension_numbers<[1], [0], [0], [1], [0, 0, 1, 1], [], []>} : vector<16x16xbf16>, vector<16x128xbf16>, vector<16x128xf32> -> vector<16x128xf32>
    %29 = arith.addf %26, %28 : vector<16x128xf32>
    %c0_18 = arith.constant 0 : index
    %c0_19 = arith.constant 0 : index
    %30 = vector.load %arg7[%c0_18, %c0_19] : memref<128x128xbf16, #tpu.memory_space<vmem>>, vector<128x128xbf16>
    %31 = arith.truncf %29 : vector<16x128xf32> to vector<16x128xbf16>
    %cst_20 = arith.constant dense<0.000000e+00> : vector<16x128xf32>
    %32 = tpu.matmul %31, %30, %cst_20 {dimension_numbers = #tpu.dot_dimension_numbers<[1], [0], [0], [1], [0, 0, 1, 1], [], []>} : vector<16x128xbf16>, vector<128x128xbf16>, vector<16x128xf32> -> vector<16x128xf32>
    %c0_21 = arith.constant 0 : index
    %c0_22 = arith.constant 0 : index
    %33 = vector.load %arg8[%c0_21, %c0_22] : memref<1x128xf32, #tpu.memory_space<vmem>>, vector<1x128xf32>
    %34 = vector.broadcast %33 : vector<1x128xf32> to vector<16x128xf32>
    %35 = arith.addf %32, %34 : vector<16x128xf32>
    %cst_23 = arith.constant 0.000000e+00 : f32
    %36 = vector.broadcast %cst_23 : f32 to vector<16x128xf32>
    %37 = arith.maximumf %35, %36 : vector<16x128xf32>
    %c0_24 = arith.constant 0 : index
    %c0_25 = arith.constant 0 : index
    %38 = vector.load %arg9[%c0_24, %c0_25] : memref<128x128xbf16, #tpu.memory_space<vmem>>, vector<128x128xbf16>
    %39 = arith.truncf %37 : vector<16x128xf32> to vector<16x128xbf16>
    %cst_26 = arith.constant dense<0.000000e+00> : vector<16x128xf32>
    %40 = tpu.matmul %39, %38, %cst_26 {dimension_numbers = #tpu.dot_dimension_numbers<[1], [0], [0], [1], [0, 0, 1, 1], [], []>} : vector<16x128xbf16>, vector<128x128xbf16>, vector<16x128xf32> -> vector<16x128xf32>
    %c0_27 = arith.constant 0 : index
    %c0_28 = arith.constant 0 : index
    %41 = vector.load %arg10[%c0_27, %c0_28] : memref<1x128xf32, #tpu.memory_space<vmem>>, vector<1x128xf32>
    %42 = vector.broadcast %41 : vector<1x128xf32> to vector<16x128xf32>
    %43 = arith.addf %40, %42 : vector<16x128xf32>
    %cst_29 = arith.constant dense<0.000000e+00> : vector<128xf32>
    %44 = vector.multi_reduction <add>, %43, %cst_29 [0] : vector<16x128xf32> to vector<128xf32>
    %45 = vector.shape_cast %44 : vector<128xf32> to vector<1x128xf32>
    %46 = arith.mulf %43, %43 : vector<16x128xf32>
    %cst_30 = arith.constant dense<0.000000e+00> : vector<128xf32>
    %47 = vector.multi_reduction <add>, %46, %cst_30 [0] : vector<16x128xf32> to vector<128xf32>
    %48 = vector.shape_cast %47 : vector<128xf32> to vector<1x128xf32>
    %cst_31 = arith.constant 6.250000e-02 : f32
    %49 = vector.broadcast %cst_31 : f32 to vector<1x128xf32>
    %50 = arith.mulf %45, %49 : vector<1x128xf32>
    %cst_32 = arith.constant 6.250000e-02 : f32
    %51 = vector.broadcast %cst_32 : f32 to vector<1x128xf32>
    %52 = arith.mulf %48, %51 : vector<1x128xf32>
    %53 = arith.mulf %50, %50 : vector<1x128xf32>
    %54 = arith.subf %52, %53 : vector<1x128xf32>
    %cst_33 = arith.constant 0.000000e+00 : f32
    %55 = vector.broadcast %cst_33 : f32 to vector<1x128xf32>
    %56 = arith.maximumf %54, %55 : vector<1x128xf32>
    %57 = vector.broadcast %50 : vector<1x128xf32> to vector<16x128xf32>
    %58 = arith.subf %43, %57 : vector<16x128xf32>
    %cst_34 = arith.constant 9.99999974E-6 : f32
    %59 = vector.broadcast %cst_34 : f32 to vector<1x128xf32>
    %60 = arith.addf %56, %59 : vector<1x128xf32>
    %61 = math.rsqrt %60 : vector<1x128xf32>
    %62 = vector.broadcast %61 : vector<1x128xf32> to vector<16x128xf32>
    %63 = arith.mulf %58, %62 : vector<16x128xf32>
    %c0_35 = arith.constant 0 : index
    %c0_36 = arith.constant 0 : index
    %64 = vector.load %arg11[%c0_35, %c0_36] : memref<1x128xf32, #tpu.memory_space<vmem>>, vector<1x128xf32>
    %65 = vector.broadcast %64 : vector<1x128xf32> to vector<16x128xf32>
    %66 = arith.mulf %63, %65 : vector<16x128xf32>
    %c0_37 = arith.constant 0 : index
    %c0_38 = arith.constant 0 : index
    %67 = vector.load %arg12[%c0_37, %c0_38] : memref<1x128xf32, #tpu.memory_space<vmem>>, vector<1x128xf32>
    %68 = vector.broadcast %67 : vector<1x128xf32> to vector<16x128xf32>
    %69 = arith.addf %66, %68 : vector<16x128xf32>
    %c0_39 = arith.constant 0 : index
    %c0_40 = arith.constant 0 : index
    %70 = vector.load %arg13[%c0_39, %c0_40] : memref<2x16xf32, #tpu.memory_space<vmem>>, vector<2x16xf32>
    %cst_41 = arith.constant dense<0.000000e+00> : vector<2xf32>
    %71 = vector.multi_reduction <add>, %70, %cst_41 [1] : vector<2x16xf32> to vector<2xf32>
    %72 = vector.shape_cast %71 : vector<2xf32> to vector<2x1xf32>
    %cst_42 = arith.constant 0.000000e+00 : f32
    %73 = vector.broadcast %cst_42 : f32 to vector<2x1xf32>
    %74 = arith.cmpf ogt, %72, %73 : vector<2x1xf32>
    %cst_43 = arith.constant 1.000000e+00 : f32
    %75 = vector.broadcast %cst_43 : f32 to vector<2x1xf32>
    %76 = arith.maximumf %72, %75 : vector<2x1xf32>
    %77 = arith.truncf %70 : vector<2x16xf32> to vector<2x16xbf16>
    %78 = arith.truncf %69 : vector<16x128xf32> to vector<16x128xbf16>
    %cst_44 = arith.constant dense<0.000000e+00> : vector<2x128xf32>
    %79 = tpu.matmul %77, %78, %cst_44 {dimension_numbers = #tpu.dot_dimension_numbers<[1], [0], [0], [1], [0, 0, 1, 1], [], []>} : vector<2x16xbf16>, vector<16x128xbf16>, vector<2x128xf32> -> vector<2x128xf32>
    %80 = vector.broadcast %76 : vector<2x1xf32> to vector<2x128xf32>
    %81 = arith.divf %79, %80 : vector<2x128xf32>
    %c0_45 = arith.constant 0 : index
    %c0_46 = arith.constant 0 : index
    %82 = vector.load %arg14[%c0_45, %c0_46] : memref<16x2xf32, #tpu.memory_space<vmem>>, vector<16x2xf32>
    %cst_47 = arith.constant 1.000000e+00 : f32
    %83 = vector.broadcast %cst_47 : f32 to vector<16x2xf32>
    %84 = arith.subf %82, %83 : vector<16x2xf32>
    %cst_48 = arith.constant 1.000000e+30 : f32
    %85 = vector.broadcast %cst_48 : f32 to vector<16x2xf32>
    %86 = arith.mulf %84, %85 : vector<16x2xf32>
    %87 = vector.extract_strided_slice %86 {offsets = [0, 0], sizes = [16, 1], strides = [1, 1]} : vector<16x2xf32> to vector<16x1xf32>
    %88 = vector.broadcast %87 : vector<16x1xf32> to vector<16x128xf32>
    %89 = arith.addf %69, %88 : vector<16x128xf32>
    %cst_49 = arith.constant dense<0xFF800000> : vector<128xf32>
    %90 = vector.multi_reduction <maximumf>, %89, %cst_49 [0] : vector<16x128xf32> to vector<128xf32>
    %91 = vector.shape_cast %90 : vector<128xf32> to vector<1x128xf32>
    %92 = vector.extract_strided_slice %86 {offsets = [0, 1], sizes = [16, 1], strides = [1, 1]} : vector<16x2xf32> to vector<16x1xf32>
    %93 = vector.broadcast %92 : vector<16x1xf32> to vector<16x128xf32>
    %94 = arith.addf %69, %93 : vector<16x128xf32>
    %cst_50 = arith.constant dense<0xFF800000> : vector<128xf32>
    %95 = vector.multi_reduction <maximumf>, %94, %cst_50 [0] : vector<16x128xf32> to vector<128xf32>
    %96 = vector.shape_cast %95 : vector<128xf32> to vector<1x128xf32>
    %97 = tpu.concatenate %91, %96 in 0 : vector<1x128xf32>, vector<1x128xf32> -> vector<2x128xf32>
    %cst_51 = arith.constant 0.000000e+00 : f32
    %98 = vector.shape_cast %74 : vector<2x1xi1> to vector<2x1xi1>
    %99 = vector.broadcast %98 : vector<2x1xi1> to vector<2x128xi1>
    %100 = vector.broadcast %cst_51 : f32 to vector<2x128xf32>
    %101 = arith.select %99, %97, %100 : vector<2x128xi1>, vector<2x128xf32>
    %cst_52 = arith.constant 0.000000e+00 : f32
    %102 = vector.shape_cast %74 : vector<2x1xi1> to vector<2x1xi1>
    %103 = vector.broadcast %102 : vector<2x1xi1> to vector<2x128xi1>
    %104 = vector.broadcast %cst_52 : f32 to vector<2x128xf32>
    %105 = arith.select %103, %81, %104 : vector<2x128xi1>, vector<2x128xf32>
    %c0_53 = arith.constant 0 : index
    %c0_54 = arith.constant 0 : index
    %106 = vector.load %arg15[%c0_53, %c0_54] : memref<128x128xbf16, #tpu.memory_space<vmem>>, vector<128x128xbf16>
    %107 = arith.truncf %101 : vector<2x128xf32> to vector<2x128xbf16>
    %cst_55 = arith.constant dense<0.000000e+00> : vector<2x128xf32>
    %108 = tpu.matmul %107, %106, %cst_55 {dimension_numbers = #tpu.dot_dimension_numbers<[1], [0], [0], [1], [0, 0, 1, 1], [], []>} : vector<2x128xbf16>, vector<128x128xbf16>, vector<2x128xf32> -> vector<2x128xf32>
    %c0_56 = arith.constant 0 : index
    %c0_57 = arith.constant 0 : index
    %109 = vector.load %arg16[%c0_56, %c0_57] : memref<128x128xbf16, #tpu.memory_space<vmem>>, vector<128x128xbf16>
    %110 = arith.truncf %105 : vector<2x128xf32> to vector<2x128xbf16>
    %cst_58 = arith.constant dense<0.000000e+00> : vector<2x128xf32>
    %111 = tpu.matmul %110, %109, %cst_58 {dimension_numbers = #tpu.dot_dimension_numbers<[1], [0], [0], [1], [0, 0, 1, 1], [], []>} : vector<2x128xbf16>, vector<128x128xbf16>, vector<2x128xf32> -> vector<2x128xf32>
    %112 = arith.addf %108, %111 : vector<2x128xf32>
    %c0_59 = arith.constant 0 : index
    %c0_60 = arith.constant 0 : index
    %113 = vector.load %arg17[%c0_59, %c0_60] : memref<1x128xf32, #tpu.memory_space<vmem>>, vector<1x128xf32>
    %114 = vector.broadcast %113 : vector<1x128xf32> to vector<2x128xf32>
    %115 = arith.addf %112, %114 : vector<2x128xf32>
    %cst_61 = arith.constant 0.000000e+00 : f32
    %116 = vector.broadcast %cst_61 : f32 to vector<2x128xf32>
    %117 = arith.maximumf %115, %116 : vector<2x128xf32>
    %c0_62 = arith.constant 0 : index
    %c0_63 = arith.constant 0 : index
    %118 = vector.load %arg18[%c0_62, %c0_63] : memref<128x128xbf16, #tpu.memory_space<vmem>>, vector<128x128xbf16>
    %119 = arith.truncf %117 : vector<2x128xf32> to vector<2x128xbf16>
    %cst_64 = arith.constant dense<0.000000e+00> : vector<2x128xf32>
    %120 = tpu.matmul %119, %118, %cst_64 {dimension_numbers = #tpu.dot_dimension_numbers<[1], [0], [0], [1], [0, 0, 1, 1], [], []>} : vector<2x128xbf16>, vector<128x128xbf16>, vector<2x128xf32> -> vector<2x128xf32>
    %c0_65 = arith.constant 0 : index
    %c0_66 = arith.constant 0 : index
    %121 = vector.load %arg19[%c0_65, %c0_66] : memref<1x128xf32, #tpu.memory_space<vmem>>, vector<1x128xf32>
    %122 = vector.broadcast %121 : vector<1x128xf32> to vector<2x128xf32>
    %123 = arith.addf %120, %122 : vector<2x128xf32>
    %c0_67 = arith.constant 0 : index
    %c0_68 = arith.constant 0 : index
    %124 = vector.load %arg20[%c0_67, %c0_68] : memref<2x128xf32, #tpu.memory_space<vmem>>, vector<2x128xf32>
    tpu.vector_store %arg20[%c0_67, %c0_68], %123 {strides = array<i32>} : memref<2x128xf32, #tpu.memory_space<vmem>>, vector<2x128xf32>,
    return
  }
}

</mosaic_0001>

<llo_original>
// kernel: tpu_custom_call.1
$region0: #{tpu_custom_call.1}
  #allocation0 [shape = 'u32[]', space=smem, size = 0x4, offset = 0x4, fixed_abs, tag = 'smem constant byte address 0x4 - core index']
  #allocation1 [shape = 'u32[144,128]{1,0:T(1,128)}', space=vmem, size = 0x12000, scoped, tag = 'internal scratch']
  #allocation2 [shape = 'f32[1]{0:T(128)S(6)}', space=smem, size = 0x200, scoped, tag = 'scoped memory for tpu_custom_call.1']
  %s0 = inlined_call_operand.<no memory space> [shape: f32[1], index: 0, kind: input, shape index: {}]
  %s1 = inlined_call_operand.vmem [shape: bf16[16,16], index: 1, kind: input, shape index: {}]
  %s2 = inlined_call_operand.hbm [shape: f32[16,128], index: 2, kind: input, shape index: {}]
  %s3 = inlined_call_operand.hbm [shape: bf16[128,128], index: 3, kind: input, shape index: {}]
  %s4 = inlined_call_operand.hbm [shape: f32[1,128], index: 4, kind: input, shape index: {}]
  %s5 = inlined_call_operand.hbm [shape: bf16[128,128], index: 5, kind: input, shape index: {}]
  %s6 = inlined_call_operand.hbm [shape: f32[1,128], index: 6, kind: input, shape index: {}]
  %s7 = inlined_call_operand.hbm [shape: bf16[128,128], index: 7, kind: input, shape index: {}]
  %s8 = inlined_call_operand.hbm [shape: f32[1,128], index: 8, kind: input, shape index: {}]
  %s9 = inlined_call_operand.hbm [shape: bf16[128,128], index: 9, kind: input, shape index: {}]
  %s10 = inlined_call_operand.hbm [shape: f32[1,128], index: 10, kind: input, shape index: {}]
  %s11 = inlined_call_operand.hbm [shape: f32[1,128], index: 11, kind: input, shape index: {}]
  %s12 = inlined_call_operand.hbm [shape: f32[1,128], index: 12, kind: input, shape index: {}]
  %s13 = inlined_call_operand.vmem [shape: f32[2,16], index: 13, kind: input, shape index: {}]
  %s14 = inlined_call_operand.vmem [shape: f32[16,2], index: 14, kind: input, shape index: {}]
  %s15 = inlined_call_operand.vmem [shape: bf16[128,128], index: 15, kind: input, shape index: {}]
  %s16 = inlined_call_operand.hbm [shape: bf16[128,128], index: 16, kind: input, shape index: {}]
  %s17 = inlined_call_operand.vmem [shape: f32[1,128], index: 17, kind: input, shape index: {}]
  %s18 = inlined_call_operand.hbm [shape: bf16[128,128], index: 18, kind: input, shape index: {}]
  %s19 = inlined_call_operand.vmem [shape: f32[1,128], index: 19, kind: input, shape index: {}]
  %s20 = inlined_call_operand.hbm [shape: f32[2,128], index: 20, kind: output, shape index: {}]
  %s21 = sld [smem:[#allocation0]]
  $region142: #{tpu_custom_call.1} parent=0
    _
  %s23 = ssub.s32 1, %s21
  %s24 = scalar_select 0, %s23, %s21
  %25 = sst [smem:[#allocation2]] %s0
  $region1: #{tpu_custom_call.1} parent=0
    #allocation3 [shape = 'u8[8192]{0}', space=vmem, size = 0x2000, scoped, tag = 'input window, operand 2, single buffered']
    #allocation4 [shape = 's32[1]{0}', space=sflag, size = 0x4, scoped, tag = 'scoped memory for tpu_custom_call.1']
    #allocation5 [shape = 's32[1]{0}', space=sflag, size = 0x4, scoped, tag = 'scoped memory for tpu_custom_call.1']
    #allocation6 [shape = 'u8[32768]{0}', space=vmem, size = 0x8000, scoped, tag = 'input window, operand 3, single buffered']
    #allocation7 [shape = 's32[1]{0}', space=sflag, size = 0x4, scoped, tag = 'scoped memory for tpu_custom_call.1']
    #allocation8 [shape = 'u8[512]{0}', space=vmem, size = 0x400, scoped, tag = 'input window, operand 4, single buffered']
    #allocation9 [shape = 'u8[32768]{0}', space=vmem, size = 0x8000, scoped, tag = 'input window, operand 5, single buffered']
    #allocation10 [shape = 's32[1]{0}', space=sflag, size = 0x4, scoped, tag = 'scoped memory for tpu_custom_call.1']
    #allocation11 [shape = 'u8[512]{0}', space=vmem, size = 0x400, scoped, tag = 'input window, operand 6, single buffered']
    #allocation12 [shape = 'u8[32768]{0}', space=vmem, size = 0x8000, scoped, tag = 'input window, operand 7, single buffered']
    #allocation13 [shape = 's32[1]{0}', space=sflag, size = 0x4, scoped, tag = 'scoped memory for tpu_custom_call.1']
    #allocation14 [shape = 'u8[512]{0}', space=vmem, size = 0x400, scoped, tag = 'input window, operand 8, single buffered']
    #allocation15 [shape = 'u8[32768]{0}', space=vmem, size = 0x8000, scoped, tag = 'input window, operand 9, single buffered']
    #allocation16 [shape = 's32[1]{0}', space=sflag, size = 0x4, scoped, tag = 'scoped memory for tpu_custom_call.1']
    #allocation17 [shape = 'u8[512]{0}', space=vmem, size = 0x400, scoped, tag = 'input window, operand 10, single buffered']
    #allocation18 [shape = 'u8[512]{0}', space=vmem, size = 0x400, scoped, tag = 'input window, operand 11, single buffered']
    #allocation19 [shape = 's32[1]{0}', space=sflag, size = 0x4, scoped, tag = 'scoped memory for tpu_custom_call.1']
    #allocation20 [shape = 'u8[512]{0}', space=vmem, size = 0x400, scoped, tag = 'input window, operand 12, single buffered']
    #allocation21 [shape = 'u8[32768]{0}', space=vmem, size = 0x8000, scoped, tag = 'input window, operand 16, single buffered']
    #allocation22 [shape = 's32[1]{0}', space=sflag, size = 0x4, scoped, tag = 'scoped memory for tpu_custom_call.1']
    #allocation23 [shape = 'u8[32768]{0}', space=vmem, size = 0x8000, scoped, tag = 'input window, operand 18, single buffered']
    #allocation24 [shape = 'u8[1024]{0}', space=vmem, size = 0x400, scoped, tag = 'output window, operand 0, single buffered']
    %26 = vsyncpa [#allocation4], 0
    %27 = vsyncpa [#allocation7], 0
    %28 = vsyncpa [#allocation10], 0
    %29 = vsyncpa [#allocation13], 0
    %30 = vsyncpa [#allocation16], 0
    %31 = vsyncpa [#allocation19], 0
    %32 = vsyncpa [#allocation22], 0
    %33 = vsyncpa [#allocation5], 0
    // Predicated region
    $region2: #{tpu_custom_call.1} parent=1 // pred_check
      _
    $region3: #{tpu_custom_call.1} parent=1 // pred_check_branch
      %35 = sbr.rel (0) target = $region5
    $region4: #{tpu_custom_call.1} parent=1 // pred_region
      _
    $region5: #{tpu_custom_call.1} parent=1 // pred_fallthru
      _
    // Predicated region
    $region6: #{tpu_custom_call.1} parent=1 // pred_check
      _
    $region7: #{tpu_custom_call.1} parent=1 // pred_check_branch
      %37 = sbr.rel (0) target = $region9
    $region8: #{tpu_custom_call.1} parent=1 // pred_region
      _
    $region9: #{tpu_custom_call.1} parent=1 // pred_fallthru
      _
    // Predicated region
    $region10: #{tpu_custom_call.1} parent=1 // pred_check
      _
    $region11: #{tpu_custom_call.1} parent=1 // pred_check_branch
      %39 = sbr.rel (0) target = $region13
    $region12: #{tpu_custom_call.1} parent=1 // pred_region
      %s41 = ssub.s32 256, 256
      %42 = vsyncadd [#allocation4], %s41
      %s43 = sshll.u32 [#allocation3], 4
      %s44 = int_to_ptr.vmem [resolvable:$true] %s43
      %49 = dma.hbm_to_vmem [thread:$0]  %s2, 256, %s44, [#allocation4], 128, 128, 8
    $region13: #{tpu_custom_call.1} parent=1 // pred_fallthru
      _
    // Predicated region
    $region14: #{tpu_custom_call.1} parent=1 // pred_check
      _
    $region15: #{tpu_custom_call.1} parent=1 // pred_check_branch
      %51 = sbr.rel (0) target = $region17
    $region16: #{tpu_custom_call.1} parent=1 // pred_region
      %s53 = ssub.s32 1024, 1024
      %54 = vsyncadd [#allocation7], %s53
      %s55 = sshll.u32 [#allocation6], 4
      %s56 = int_to_ptr.vmem [resolvable:$true] %s55
      %61 = dma.hbm_to_vmem [thread:$0]  %s3, 1024, %s56, [#allocation7], 64, 64, 4
    $region17: #{tpu_custom_call.1} parent=1 // pred_fallthru
      _
    // Predicated region
    $region18: #{tpu_custom_call.1} parent=1 // pred_check
      _
    $region19: #{tpu_custom_call.1} parent=1 // pred_check_branch
      %63 = sbr.rel (0) target = $region21
    $region20: #{tpu_custom_call.1} parent=1 // pred_region
      %s65 = ssub.s32 16, 16
      %66 = vsyncadd [#allocation7], %s65
      %s68 = sshll.u32 [#allocation8], 4
      %s69 = int_to_ptr.vmem [resolvable:$true] %s68
      %71 = dma.hbm_to_vmem [thread:$0]  %s4, 16, %s69, [#allocation7]
    $region21: #{tpu_custom_call.1} parent=1 // pred_fallthru
      _
    // Predicated region
    $region22: #{tpu_custom_call.1} parent=1 // pred_check
      _
    $region23: #{tpu_custom_call.1} parent=1 // pred_check_branch
      %73 = sbr.rel (0) target = $region25
    $region24: #{tpu_custom_call.1} parent=1 // pred_region
      %s75 = ssub.s32 1024, 1024
      %76 = vsyncadd [#allocation10], %s75
      %s77 = sshll.u32 [#allocation9], 4
      %s78 = int_to_ptr.vmem [resolvable:$true] %s77
      %83 = dma.hbm_to_vmem [thread:$0]  %s5, 1024, %s78, [#allocation10], 64, 64, 4
    $region25: #{tpu_custom_call.1} parent=1 // pred_fallthru
      _
    // Predicated region
    $region26: #{tpu_custom_call.1} parent=1 // pred_check
      _
    $region27: #{tpu_custom_call.1} parent=1 // pred_check_branch
      %85 = sbr.rel (0) target = $region29
    $region28: #{tpu_custom_call.1} parent=1 // pred_region
      %s87 = ssub.s32 16, 16
      %88 = vsyncadd [#allocation10], %s87
      %s90 = sshll.u32 [#allocation11], 4
      %s91 = int_to_ptr.vmem [resolvable:$true] %s90
      %93 = dma.hbm_to_vmem [thread:$0]  %s6, 16, %s91, [#allocation10]
    $region29: #{tpu_custom_call.1} parent=1 // pred_fallthru
      _
    // Predicated region
    $region30: #{tpu_custom_call.1} parent=1 // pred_check
      _
    $region31: #{tpu_custom_call.1} parent=1 // pred_check_branch
      %95 = sbr.rel (0) target = $region33
    $region32: #{tpu_custom_call.1} parent=1 // pred_region
      %s97 = ssub.s32 1024, 1024
      %98 = vsyncadd [#allocation13], %s97
      %s99 = sshll.u32 [#allocation12], 4
      %s100 = int_to_ptr.vmem [resolvable:$true] %s99
      %105 = dma.hbm_to_vmem [thread:$0]  %s7, 1024, %s100, [#allocation13], 64, 64, 4
    $region33: #{tpu_custom_call.1} parent=1 // pred_fallthru
      _
    // Predicated region
    $region34: #{tpu_custom_call.1} parent=1 // pred_check
      _
    $region35: #{tpu_custom_call.1} parent=1 // pred_check_branch
      %107 = sbr.rel (0) target = $region37
    $region36: #{tpu_custom_call.1} parent=1 // pred_region
      %s109 = ssub.s32 16, 16
      %110 = vsyncadd [#allocation13], %s109
      %s112 = sshll.u32 [#allocation14], 4
      %s113 = int_to_ptr.vmem [resolvable:$true] %s112
      %115 = dma.hbm_to_vmem [thread:$0]  %s8, 16, %s113, [#allocation13]
    $region37: #{tpu_custom_call.1} parent=1 // pred_fallthru
      _
    // Predicated region
    $region38: #{tpu_custom_call.1} parent=1 // pred_check
      _
    $region39: #{tpu_custom_call.1} parent=1 // pred_check_branch
      %117 = sbr.rel (0) target = $region41
    $region40: #{tpu_custom_call.1} parent=1 // pred_region
      %s119 = ssub.s32 1024, 1024
      %120 = vsyncadd [#allocation16], %s119
      %s121 = sshll.u32 [#allocation15], 4
      %s122 = int_to_ptr.vmem [resolvable:$true] %s121
      %127 = dma.hbm_to_vmem [thread:$0]  %s9, 1024, %s122, [#allocation16], 64, 64, 4
    $region41: #{tpu_custom_call.1} parent=1 // pred_fallthru
      _
    // Predicated region
    $region42: #{tpu_custom_call.1} parent=1 // pred_check
      _
    $region43: #{tpu_custom_call.1} parent=1 // pred_check_branch
      %129 = sbr.rel (0) target = $region45
    $region44: #{tpu_custom_call.1} parent=1 // pred_region
      %s131 = ssub.s32 16, 16
      %132 = vsyncadd [#allocation16], %s131
      %s134 = sshll.u32 [#allocation17], 4
      %s135 = int_to_ptr.vmem [resolvable:$true] %s134
      %137 = dma.hbm_to_vmem [thread:$0]  %s10, 16, %s135, [#allocation16]
    $region45: #{tpu_custom_call.1} parent=1 // pred_fallthru
      _
    // Predicated region
    $region46: #{tpu_custom_call.1} parent=1 // pred_check
      _
    $region47: #{tpu_custom_call.1} parent=1 // pred_check_branch
      %139 = sbr.rel (0) target = $region49
    $region48: #{tpu_custom_call.1} parent=1 // pred_region
      %s141 = ssub.s32 16, 16
      %142 = vsyncadd [#allocation19], %s141
      %s144 = sshll.u32 [#allocation18], 4
      %s145 = int_to_ptr.vmem [resolvable:$true] %s144
      %147 = dma.hbm_to_vmem [thread:$0]  %s11, 16, %s145, [#allocation19]
    $region49: #{tpu_custom_call.1} parent=1 // pred_fallthru
      _
    // Predicated region
    $region50: #{tpu_custom_call.1} parent=1 // pred_check
      _
    $region51: #{tpu_custom_call.1} parent=1 // pred_check_branch
      %149 = sbr.rel (0) target = $region53
    $region52: #{tpu_custom_call.1} parent=1 // pred_region
      %s151 = ssub.s32 16, 16
      %152 = vsyncadd [#allocation19], %s151
      %s154 = sshll.u32 [#allocation20], 4
      %s155 = int_to_ptr.vmem [resolvable:$true] %s154
      %157 = dma.hbm_to_vmem [thread:$0]  %s12, 16, %s155, [#allocation19]
    $region53: #{tpu_custom_call.1} parent=1 // pred_fallthru
      _
    // Predicated region
    $region54: #{tpu_custom_call.1} parent=1 // pred_check
      _
    $region55: #{tpu_custom_call.1} parent=1 // pred_check_branch
      %159 = sbr.rel (0) target = $region57
    $region56: #{tpu_custom_call.1} parent=1 // pred_region
      _
    $region57: #{tpu_custom_call.1} parent=1 // pred_fallthru
      _
    // Predicated region
    $region58: #{tpu_custom_call.1} parent=1 // pred_check
      _
    $region59: #{tpu_custom_call.1} parent=1 // pred_check_branch
      %161 = sbr.rel (0) target = $region61
    $region60: #{tpu_custom_call.1} parent=1 // pred_region
      _
    $region61: #{tpu_custom_call.1} parent=1 // pred_fallthru
      _
    // Predicated region
    $region62: #{tpu_custom_call.1} parent=1 // pred_check
      _
    $region63: #{tpu_custom_call.1} parent=1 // pred_check_branch
      %163 = sbr.rel (0) target = $region65
    $region64: #{tpu_custom_call.1} parent=1 // pred_region
      _
    $region65: #{tpu_custom_call.1} parent=1 // pred_fallthru
      _
    // Predicated region
    $region66: #{tpu_custom_call.1} parent=1 // pred_check
      _
    $region67: #{tpu_custom_call.1} parent=1 // pred_check_branch
      %165 = sbr.rel (0) target = $region69
    $region68: #{tpu_custom_call.1} parent=1 // pred_region
      %s167 = ssub.s32 1024, 1024
      %168 = vsyncadd [#allocation22], %s167
      %s169 = sshll.u32 [#allocation21], 4
      %s170 = int_to_ptr.vmem [resolvable:$true] %s169
      %175 = dma.hbm_to_vmem [thread:$0]  %s16, 1024, %s170, [#allocation22], 64, 64, 4
    $region69: #{tpu_custom_call.1} parent=1 // pred_fallthru
      _
    // Predicated region
    $region70: #{tpu_custom_call.1} parent=1 // pred_check
      _
    $region71: #{tpu_custom_call.1} parent=1 // pred_check_branch
      %177 = sbr.rel (0) target = $region73
    $region72: #{tpu_custom_call.1} parent=1 // pred_region
      _
    $region73: #{tpu_custom_call.1} parent=1 // pred_fallthru
      _
    // Predicated region
    $region74: #{tpu_custom_call.1} parent=1 // pred_check
      _
    $region75: #{tpu_custom_call.1} parent=1 // pred_check_branch
      %179 = sbr.rel (0) target = $region77
    $region76: #{tpu_custom_call.1} parent=1 // pred_region
      %s181 = ssub.s32 1024, 1024
      %182 = vsyncadd [#allocation22], %s181
      %s183 = sshll.u32 [#allocation23], 4
      %s184 = int_to_ptr.vmem [resolvable:$true] %s183
      %189 = dma.hbm_to_vmem [thread:$0]  %s18, 1024, %s184, [#allocation22], 64, 64, 4
    $region77: #{tpu_custom_call.1} parent=1 // pred_fallthru
      _
    // Predicated region
    $region78: #{tpu_custom_call.1} parent=1 // pred_check
      _
    $region79: #{tpu_custom_call.1} parent=1 // pred_check_branch
      %191 = sbr.rel (0) target = $region81
    $region80: #{tpu_custom_call.1} parent=1 // pred_region
      _
    $region81: #{tpu_custom_call.1} parent=1 // pred_fallthru
      _
    // Predicated region
    $region82: #{tpu_custom_call.1} parent=1 // pred_check
      _
    $region83: #{tpu_custom_call.1} parent=1 // pred_check_branch
      %193 = sbr.rel (0) target = $region85
    $region84: #{tpu_custom_call.1} parent=1 // pred_region
      %194 = dma.done [#allocation4], 256
    $region85: #{tpu_custom_call.1} parent=1 // pred_fallthru
      _
    // Predicated region
    $region86: #{tpu_custom_call.1} parent=1 // pred_check
      _
    $region87: #{tpu_custom_call.1} parent=1 // pred_check_branch
      %196 = sbr.rel (0) target = $region89
    $region88: #{tpu_custom_call.1} parent=1 // pred_region
      %197 = dma.done [#allocation7], 1024
    $region89: #{tpu_custom_call.1} parent=1 // pred_fallthru
      _
    // Predicated region
    $region90: #{tpu_custom_call.1} parent=1 // pred_check
      _
    $region91: #{tpu_custom_call.1} parent=1 // pred_check_branch
      %199 = sbr.rel (0) target = $region93
    $region92: #{tpu_custom_call.1} parent=1 // pred_region
      %200 = dma.done [#allocation7], 16
    $region93: #{tpu_custom_call.1} parent=1 // pred_fallthru
      _
    // Predicated region
    $region94: #{tpu_custom_call.1} parent=1 // pred_check
      _
    $region95: #{tpu_custom_call.1} parent=1 // pred_check_branch
      %202 = sbr.rel (0) target = $region97
    $region96: #{tpu_custom_call.1} parent=1 // pred_region
      %203 = dma.done [#allocation10], 1024
    $region97: #{tpu_custom_call.1} parent=1 // pred_fallthru
      _
    // Predicated region
    $region98: #{tpu_custom_call.1} parent=1 // pred_check
      _
    $region99: #{tpu_custom_call.1} parent=1 // pred_check_branch
      %205 = sbr.rel (0) target = $region101
    $region100: #{tpu_custom_call.1} parent=1 // pred_region
      %206 = dma.done [#allocation10], 16
    $region101: #{tpu_custom_call.1} parent=1 // pred_fallthru
      _
    // Predicated region
    $region102: #{tpu_custom_call.1} parent=1 // pred_check
      _
    $region103: #{tpu_custom_call.1} parent=1 // pred_check_branch
      %208 = sbr.rel (0) target = $region105
    $region104: #{tpu_custom_call.1} parent=1 // pred_region
      %209 = dma.done [#allocation13], 1024
    $region105: #{tpu_custom_call.1} parent=1 // pred_fallthru
      _
    // Predicated region
    $region106: #{tpu_custom_call.1} parent=1 // pred_check
      _
    $region107: #{tpu_custom_call.1} parent=1 // pred_check_branch
      %211 = sbr.rel (0) target = $region109
    $region108: #{tpu_custom_call.1} parent=1 // pred_region
      %212 = dma.done [#allocation13], 16
    $region109: #{tpu_custom_call.1} parent=1 // pred_fallthru
      _
    // Predicated region
    $region110: #{tpu_custom_call.1} parent=1 // pred_check
      _
    $region111: #{tpu_custom_call.1} parent=1 // pred_check_branch
      %214 = sbr.rel (0) target = $region113
    $region112: #{tpu_custom_call.1} parent=1 // pred_region
      %215 = dma.done [#allocation16], 1024
    $region113: #{tpu_custom_call.1} parent=1 // pred_fallthru
      _
    // Predicated region
    $region114: #{tpu_custom_call.1} parent=1 // pred_check
      _
    $region115: #{tpu_custom_call.1} parent=1 // pred_check_branch
      %217 = sbr.rel (0) target = $region117
    $region116: #{tpu_custom_call.1} parent=1 // pred_region
      %218 = dma.done [#allocation16], 16
    $region117: #{tpu_custom_call.1} parent=1 // pred_fallthru
      _
    // Predicated region
    $region118: #{tpu_custom_call.1} parent=1 // pred_check
      _
    $region119: #{tpu_custom_call.1} parent=1 // pred_check_branch
      %220 = sbr.rel (0) target = $region121
    $region120: #{tpu_custom_call.1} parent=1 // pred_region
      %221 = dma.done [#allocation19], 16
    $region121: #{tpu_custom_call.1} parent=1 // pred_fallthru
      _
    // Predicated region
    $region122: #{tpu_custom_call.1} parent=1 // pred_check
      _
    $region123: #{tpu_custom_call.1} parent=1 // pred_check_branch
      %223 = sbr.rel (0) target = $region125
    $region124: #{tpu_custom_call.1} parent=1 // pred_region
      %224 = dma.done [#allocation19], 16
    $region125: #{tpu_custom_call.1} parent=1 // pred_fallthru
      _
    // Predicated region
    $region126: #{tpu_custom_call.1} parent=1 // pred_check
      _
    $region127: #{tpu_custom_call.1} parent=1 // pred_check_branch
      %226 = sbr.rel (0) target = $region129
    $region128: #{tpu_custom_call.1} parent=1 // pred_region
      %227 = dma.done [#allocation22], 1024
    $region129: #{tpu_custom_call.1} parent=1 // pred_fallthru
      _
    // Predicated region
    $region130: #{tpu_custom_call.1} parent=1 // pred_check
      _
    $region131: #{tpu_custom_call.1} parent=1 // pred_check_branch
      %229 = sbr.rel (0) target = $region133
    $region132: #{tpu_custom_call.1} parent=1 // pred_region
      %230 = dma.done [#allocation22], 1024
    $region133: #{tpu_custom_call.1} parent=1 // pred_fallthru
      _
    %v232 = vld [vmem:[%s1] sm:$0xf]
    %v233 = vld [vmem:[%s1 + $0x4] sm:$0xf]
    %v234 = vld [vmem:[#allocation3] sm:$0xff]
    %v235 = vld [vmem:[#allocation3 + $0x8] sm:$0xff]
    %s236 = sld [smem:[#allocation2]]
    %s237 = sadd.f32 %s236, 1.0
    %v238 = vstv %s237
    %v239 = vmul.f32 %v238, %v234
    %v240 = vmul.f32 %v238, %v235
    %v241 = vpack.c.bf16 %v235, %v234
    %v244 = vunpack.c.l.b16 %v232
    %v245 = vunpack.c.l.b16 %v233
    %v246 = vpack.c.b16 %v245, %v244
    %vm247 = vcmask 130048
    %v249 = vsel %vm247, %v246, 0
    %251 = vmatprep.subr.bf16.mxu0 0
    %252 = vmatpush1.bf16.msra.mxu0 %v241
    %253 = vmatprep.subr.bf16.mxu0 0
    %254 = vmatpush1.bf16.msra.mxu0 0
    %255 = vmatprep.subr.bf16.mxu0 0
    %256 = vmatpush1.bf16.msra.mxu0 0
    %257 = vmatprep.subr.bf16.mxu0 0
    %258 = vmatpush1.bf16.msra.mxu0 0
    %259 = vmatprep.subr.bf16.mxu0 0
    %260 = vmatpush1.bf16.msra.mxu0 0
    %261 = vmatprep.subr.bf16.mxu0 0
    %262 = vmatpush1.bf16.msra.mxu0 0
    %263 = vmatprep.subr.bf16.mxu0 0
    %264 = vmatpush1.bf16.msra.mxu0 0
    %265 = vmatprep.subr.bf16.mxu0 0
    %266 = vmatpush1.bf16.msra.mxu0 0
    %267 = vmatprep.subr.bf16.mxu0 0
    %268 = vmatpush1.bf16.msra.mxu0 0
    %269 = vmatprep.subr.bf16.mxu0 0
    %270 = vmatpush1.bf16.msra.mxu0 0
    %271 = vmatprep.subr.bf16.mxu0 0
    %272 = vmatpush1.bf16.msra.mxu0 0
    %273 = vmatprep.subr.bf16.mxu0 0
    %274 = vmatpush1.bf16.msra.mxu0 0
    %275 = vmatprep.subr.bf16.mxu0 0
    %276 = vmatpush1.bf16.msra.mxu0 0
    %277 = vmatprep.subr.bf16.mxu0 0
    %278 = vmatpush1.bf16.msra.mxu0 0
    %279 = vmatprep.subr.bf16.mxu0 0
    %280 = vmatpush1.bf16.msra.mxu0 0
    %281 = vmatprep.subr.bf16.mxu0 0
    %282 = vmatpush1.bf16.msra.mxu0 0
    %283 = vmatprep.mubr.bf16.mxu0 0
    %284 = vmatmul.mubr.bf16.gmra.mrb[0].mxu0 %v249
    %v285 = vpop.f32.mrb[0].mxu0
    %v286 = vadd.f32 0.0, %v285
    %v287 = vpop.f32.mrb[0].mxu0
    %v288 = vpop.f32.mrb[0].mxu0
    %v289 = vadd.f32 0.0, %v288
    %v290 = vpop.f32.mrb[0].mxu0
    %291 = vdwg.mxu0
    %v292 = vadd.f32 %v239, %v286
    %v293 = vadd.f32 %v240, %v289
    %v294 = vld [vmem:[#allocation6] sm:$0xf]
    %v295 = vld [vmem:[#allocation6 + $0x4] sm:$0xf]
    %v296 = vld [vmem:[#allocation6 + $0x8] sm:$0xf]
    %v297 = vld [vmem:[#allocation6 + $0xc] sm:$0xf]
    %v298 = vld [vmem:[#allocation6 + $0x10] sm:$0xf]
    %v299 = vld [vmem:[#allocation6 + $0x14] sm:$0xf]
    %v300 = vld [vmem:[#allocation6 + $0x18] sm:$0xf]
    %v301 = vld [vmem:[#allocation6 + $0x1c] sm:$0xf]
    %v302 = vld [vmem:[#allocation6 + $0x20] sm:$0xf]
    %v303 = vld [vmem:[#allocation6 + $0x24] sm:$0xf]
    %v304 = vld [vmem:[#allocation6 + $0x28] sm:$0xf]
    %v305 = vld [vmem:[#allocation6 + $0x2c] sm:$0xf]
    %v306 = vld [vmem:[#allocation6 + $0x30] sm:$0xf]
    %v307 = vld [vmem:[#allocation6 + $0x34] sm:$0xf]
    %v308 = vld [vmem:[#allocation6 + $0x38] sm:$0xf]
    %v309 = vld [vmem:[#allocation6 + $0x3c] sm:$0xf]
    %v310 = vpack.c.bf16 %v293, %v292
    %v311 = vld [vmem:[#allocation8] sm:$0x1]
    %v313 = vlaneseq
    %v314 = vshrl.u32 %v313, 7
    %v315 = vsub.s32 0, %v314
    %v316 = vrot.slane %v311, %v315
    %v334 = vunpack.c.l.b16 %v294
    %v335 = vunpack.c.l.b16 %v295
    %v336 = vunpack.c.l.b16 %v296
    %v337 = vunpack.c.l.b16 %v297
    %v338 = vunpack.c.l.b16 %v298
    %v339 = vunpack.c.l.b16 %v299
    %v340 = vunpack.c.l.b16 %v300
    %v341 = vunpack.c.l.b16 %v301
    %v342 = vunpack.c.l.b16 %v302
    %v343 = vunpack.c.l.b16 %v303
    %v344 = vunpack.c.l.b16 %v304
    %v345 = vunpack.c.l.b16 %v305
    %v346 = vunpack.c.l.b16 %v306
    %v347 = vunpack.c.l.b16 %v307
    %v348 = vunpack.c.l.b16 %v308
    %v349 = vunpack.c.l.b16 %v309
    %v350 = vpack.c.b16 %v335, %v334
    %v351 = vpack.c.b16 %v337, %v336
    %v352 = vpack.c.b16 %v339, %v338
    %v353 = vpack.c.b16 %v341, %v340
    %v354 = vpack.c.b16 %v343, %v342
    %v355 = vpack.c.b16 %v345, %v344
    %v356 = vpack.c.b16 %v347, %v346
    %v357 = vpack.c.b16 %v349, %v348
    %366 = vmatprep.subr.bf16.mxu0 0
    %367 = vmatpush1.bf16.msra.mxu0 %v350
    %368 = vmatprep.subr.bf16.mxu0 0
    %369 = vmatpush1.bf16.msra.mxu0 %v351
    %370 = vmatprep.subr.bf16.mxu0 0
    %371 = vmatpush1.bf16.msra.mxu0 %v352
    %372 = vmatprep.subr.bf16.mxu0 0
    %373 = vmatpush1.bf16.msra.mxu0 %v353
    %374 = vmatprep.subr.bf16.mxu0 0
    %375 = vmatpush1.bf16.msra.mxu0 %v354
    %376 = vmatprep.subr.bf16.mxu0 0
    %377 = vmatpush1.bf16.msra.mxu0 %v355
    %378 = vmatprep.subr.bf16.mxu0 0
    %379 = vmatpush1.bf16.msra.mxu0 %v356
    %380 = vmatprep.subr.bf16.mxu0 0
    %381 = vmatpush1.bf16.msra.mxu0 %v357
    %382 = vmatprep.subr.bf16.mxu0 0
    %383 = vmatpush1.bf16.msra.mxu0 0
    %384 = vmatprep.subr.bf16.mxu0 0
    %385 = vmatpush1.bf16.msra.mxu0 0
    %386 = vmatprep.subr.bf16.mxu0 0
    %387 = vmatpush1.bf16.msra.mxu0 0
    %388 = vmatprep.subr.bf16.mxu0 0
    %389 = vmatpush1.bf16.msra.mxu0 0
    %390 = vmatprep.subr.bf16.mxu0 0
    %391 = vmatpush1.bf16.msra.mxu0 0
    %392 = vmatprep.subr.bf16.mxu0 0
    %393 = vmatpush1.bf16.msra.mxu0 0
    %394 = vmatprep.subr.bf16.mxu0 0
    %395 = vmatpush1.bf16.msra.mxu0 0
    %396 = vmatprep.subr.bf16.mxu0 0
    %397 = vmatpush1.bf16.msra.mxu0 0
    %398 = vmatprep.mubr.bf16.mxu0 0
    %399 = vmatmul.mubr.bf16.gmra.mrb[0].mxu0 %v310
    %v400 = vpop.f32.mrb[0].mxu0
    %v401 = vadd.f32 %v316, %v400
    %v402 = vpop.f32.mrb[0].mxu0
    %v403 = vpop.f32.mrb[0].mxu0
    %v404 = vadd.f32 %v316, %v403
    %v405 = vpop.f32.mrb[0].mxu0
    %406 = vdwg.mxu0
    %v407 = vmax.f32 %v401, 0.0
    %v408 = vmax.f32 %v404, 0.0
    %v409 = vld [vmem:[#allocation9] sm:$0xf]
    %v410 = vld [vmem:[#allocation9 + $0x4] sm:$0xf]
    %v411 = vld [vmem:[#allocation9 + $0x8] sm:$0xf]
    %v412 = vld [vmem:[#allocation9 + $0xc] sm:$0xf]
    %v413 = vld [vmem:[#allocation9 + $0x10] sm:$0xf]
    %v414 = vld [vmem:[#allocation9 + $0x14] sm:$0xf]
    %v415 = vld [vmem:[#allocation9 + $0x18] sm:$0xf]
    %v416 = vld [vmem:[#allocation9 + $0x1c] sm:$0xf]
    %v417 = vld [vmem:[#allocation9 + $0x20] sm:$0xf]
    %v418 = vld [vmem:[#allocation9 + $0x24] sm:$0xf]
    %v419 = vld [vmem:[#allocation9 + $0x28] sm:$0xf]
    %v420 = vld [vmem:[#allocation9 + $0x2c] sm:$0xf]
    %v421 = vld [vmem:[#allocation9 + $0x30] sm:$0xf]
    %v422 = vld [vmem:[#allocation9 + $0x34] sm:$0xf]
    %v423 = vld [vmem:[#allocation9 + $0x38] sm:$0xf]
    %v424 = vld [vmem:[#allocation9 + $0x3c] sm:$0xf]
    %v425 = vpack.c.bf16 %v408, %v407
    %v426 = vld [vmem:[#allocation11] sm:$0x1]
    %v428 = vlaneseq
    %v429 = vshrl.u32 %v428, 7
    %v430 = vsub.s32 0, %v429
    %v431 = vrot.slane %v426, %v430
    %v449 = vunpack.c.l.b16 %v409
    %v450 = vunpack.c.l.b16 %v410
    %v451 = vunpack.c.l.b16 %v411
    %v452 = vunpack.c.l.b16 %v412
    %v453 = vunpack.c.l.b16 %v413
    %v454 = vunpack.c.l.b16 %v414
    %v455 = vunpack.c.l.b16 %v415
    %v456 = vunpack.c.l.b16 %v416
    %v457 = vunpack.c.l.b16 %v417
    %v458 = vunpack.c.l.b16 %v418
    %v459 = vunpack.c.l.b16 %v419
    %v460 = vunpack.c.l.b16 %v420
    %v461 = vunpack.c.l.b16 %v421
    %v462 = vunpack.c.l.b16 %v422
    %v463 = vunpack.c.l.b16 %v423
    %v464 = vunpack.c.l.b16 %v424
    %v465 = vpack.c.b16 %v450, %v449
    %v466 = vpack.c.b16 %v452, %v451
    %v467 = vpack.c.b16 %v454, %v453
    %v468 = vpack.c.b16 %v456, %v455
    %v469 = vpack.c.b16 %v458, %v457
    %v470 = vpack.c.b16 %v460, %v459
    %v471 = vpack.c.b16 %v462, %v461
    %v472 = vpack.c.b16 %v464, %v463
    %481 = vmatprep.subr.bf16.mxu0 0
    %482 = vmatpush1.bf16.msra.mxu0 %v465
    %483 = vmatprep.subr.bf16.mxu0 0
    %484 = vmatpush1.bf16.msra.mxu0 %v466
    %485 = vmatprep.subr.bf16.mxu0 0
    %486 = vmatpush1.bf16.msra.mxu0 %v467
    %487 = vmatprep.subr.bf16.mxu0 0
    %488 = vmatpush1.bf16.msra.mxu0 %v468
    %489 = vmatprep.subr.bf16.mxu0 0
    %490 = vmatpush1.bf16.msra.mxu0 %v469
    %491 = vmatprep.subr.bf16.mxu0 0
    %492 = vmatpush1.bf16.msra.mxu0 %v470
    %493 = vmatprep.subr.bf16.mxu0 0
    %494 = vmatpush1.bf16.msra.mxu0 %v471
    %495 = vmatprep.subr.bf16.mxu0 0
    %496 = vmatpush1.bf16.msra.mxu0 %v472
    %497 = vmatprep.subr.bf16.mxu0 0
    %498 = vmatpush1.bf16.msra.mxu0 0
    %499 = vmatprep.subr.bf16.mxu0 0
    %500 = vmatpush1.bf16.msra.mxu0 0
    %501 = vmatprep.subr.bf16.mxu0 0
    %502 = vmatpush1.bf16.msra.mxu0 0
    %503 = vmatprep.subr.bf16.mxu0 0
    %504 = vmatpush1.bf16.msra.mxu0 0
    %505 = vmatprep.subr.bf16.mxu0 0
    %506 = vmatpush1.bf16.msra.mxu0 0
    %507 = vmatprep.subr.bf16.mxu0 0
    %508 = vmatpush1.bf16.msra.mxu0 0
    %509 = vmatprep.subr.bf16.mxu0 0
    %510 = vmatpush1.bf16.msra.mxu0 0
    %511 = vmatprep.subr.bf16.mxu0 0
    %512 = vmatpush1.bf16.msra.mxu0 0
    %513 = vmatprep.mubr.bf16.mxu0 0
    %514 = vmatmul.mubr.bf16.gmra.mrb[0].mxu0 %v425
    %v515 = vpop.f32.mrb[0].mxu0
    %v516 = vadd.f32 %v431, %v515
    %v517 = vpop.f32.mrb[0].mxu0
    %v518 = vpop.f32.mrb[0].mxu0
    %v519 = vadd.f32 %v431, %v518
    %v520 = vpop.f32.mrb[0].mxu0
    %521 = vdwg.mxu0
    %v522 = vmax.f32 %v516, 0.0
    %v523 = vmax.f32 %v519, 0.0
    %v524 = vmul.f32 %v238, %v522
    %v525 = vmul.f32 %v238, %v523
    %v526 = vpack.c.bf16 %v523, %v522
    %527 = vmatprep.subr.bf16.mxu0 0
    %528 = vmatpush1.bf16.msra.mxu0 %v526
    %529 = vmatprep.subr.bf16.mxu0 0
    %530 = vmatpush1.bf16.msra.mxu0 0
    %531 = vmatprep.subr.bf16.mxu0 0
    %532 = vmatpush1.bf16.msra.mxu0 0
    %533 = vmatprep.subr.bf16.mxu0 0
    %534 = vmatpush1.bf16.msra.mxu0 0
    %535 = vmatprep.subr.bf16.mxu0 0
    %536 = vmatpush1.bf16.msra.mxu0 0
    %537 = vmatprep.subr.bf16.mxu0 0
    %538 = vmatpush1.bf16.msra.mxu0 0
    %539 = vmatprep.subr.bf16.mxu0 0
    %540 = vmatpush1.bf16.msra.mxu0 0
    %541 = vmatprep.subr.bf16.mxu0 0
    %542 = vmatpush1.bf16.msra.mxu0 0
    %543 = vmatprep.subr.bf16.mxu0 0
    %544 = vmatpush1.bf16.msra.mxu0 0
    %545 = vmatprep.subr.bf16.mxu0 0
    %546 = vmatpush1.bf16.msra.mxu0 0
    %547 = vmatprep.subr.bf16.mxu0 0
    %548 = vmatpush1.bf16.msra.mxu0 0
    %549 = vmatprep.subr.bf16.mxu0 0
    %550 = vmatpush1.bf16.msra.mxu0 0
    %551 = vmatprep.subr.bf16.mxu0 0
    %552 = vmatpush1.bf16.msra.mxu0 0
    %553 = vmatprep.subr.bf16.mxu0 0
    %554 = vmatpush1.bf16.msra.mxu0 0
    %555 = vmatprep.subr.bf16.mxu0 0
    %556 = vmatpush1.bf16.msra.mxu0 0
    %557 = vmatprep.subr.bf16.mxu0 0
    %558 = vmatpush1.bf16.msra.mxu0 0
    %559 = vmatprep.mubr.bf16.mxu0 0
    %560 = vmatmul.mubr.bf16.gmra.mrb[0].mxu0 %v249
    %v561 = vpop.f32.mrb[0].mxu0
    %v562 = vadd.f32 0.0, %v561
    %v563 = vpop.f32.mrb[0].mxu0
    %v564 = vpop.f32.mrb[0].mxu0
    %v565 = vadd.f32 0.0, %v564
    %v566 = vpop.f32.mrb[0].mxu0
    %567 = vdwg.mxu0
    %v568 = vadd.f32 %v524, %v562
    %v569 = vadd.f32 %v525, %v565
    %v570 = vld [vmem:[#allocation12] sm:$0xf]
    %v571 = vld [vmem:[#allocation12 + $0x4] sm:$0xf]
    %v572 = vld [vmem:[#allocation12 + $0x8] sm:$0xf]
    %v573 = vld [vmem:[#allocation12 + $0xc] sm:$0xf]
    %v574 = vld [vmem:[#allocation12 + $0x10] sm:$0xf]
    %v575 = vld [vmem:[#allocation12 + $0x14] sm:$0xf]
    %v576 = vld [vmem:[#allocation12 + $0x18] sm:$0xf]
    %v577 = vld [vmem:[#allocation12 + $0x1c] sm:$0xf]
    %v578 = vld [vmem:[#allocation12 + $0x20] sm:$0xf]
    %v579 = vld [vmem:[#allocation12 + $0x24] sm:$0xf]
    %v580 = vld [vmem:[#allocation12 + $0x28] sm:$0xf]
    %v581 = vld [vmem:[#allocation12 + $0x2c] sm:$0xf]
    %v582 = vld [vmem:[#allocation12 + $0x30] sm:$0xf]
    %v583 = vld [vmem:[#allocation12 + $0x34] sm:$0xf]
    %v584 = vld [vmem:[#allocation12 + $0x38] sm:$0xf]
    %v585 = vld [vmem:[#allocation12 + $0x3c] sm:$0xf]
    %v586 = vpack.c.bf16 %v569, %v568
    %v587 = vld [vmem:[#allocation14] sm:$0x1]
    %v589 = vlaneseq
    %v590 = vshrl.u32 %v589, 7
    %v591 = vsub.s32 0, %v590
    %v592 = vrot.slane %v587, %v591
    %v610 = vunpack.c.l.b16 %v570
    %v611 = vunpack.c.l.b16 %v571
    %v612 = vunpack.c.l.b16 %v572
    %v613 = vunpack.c.l.b16 %v573
    %v614 = vunpack.c.l.b16 %v574
    %v615 = vunpack.c.l.b16 %v575
    %v616 = vunpack.c.l.b16 %v576
    %v617 = vunpack.c.l.b16 %v577
    %v618 = vunpack.c.l.b16 %v578
    %v619 = vunpack.c.l.b16 %v579
    %v620 = vunpack.c.l.b16 %v580
    %v621 = vunpack.c.l.b16 %v581
    %v622 = vunpack.c.l.b16 %v582
    %v623 = vunpack.c.l.b16 %v583
    %v624 = vunpack.c.l.b16 %v584
    %v625 = vunpack.c.l.b16 %v585
    %v626 = vpack.c.b16 %v611, %v610
    %v627 = vpack.c.b16 %v613, %v612
    %v628 = vpack.c.b16 %v615, %v614
    %v629 = vpack.c.b16 %v617, %v616
    %v630 = vpack.c.b16 %v619, %v618
    %v631 = vpack.c.b16 %v621, %v620
    %v632 = vpack.c.b16 %v623, %v622
    %v633 = vpack.c.b16 %v625, %v624
    %642 = vmatprep.subr.bf16.mxu0 0
    %643 = vmatpush1.bf16.msra.mxu0 %v626
    %644 = vmatprep.subr.bf16.mxu0 0
    %645 = vmatpush1.bf16.msra.mxu0 %v627
    %646 = vmatprep.subr.bf16.mxu0 0
    %647 = vmatpush1.bf16.msra.mxu0 %v628
    %648 = vmatprep.subr.bf16.mxu0 0
    %649 = vmatpush1.bf16.msra.mxu0 %v629
    %650 = vmatprep.subr.bf16.mxu0 0
    %651 = vmatpush1.bf16.msra.mxu0 %v630
    %652 = vmatprep.subr.bf16.mxu0 0
    %653 = vmatpush1.bf16.msra.mxu0 %v631
    %654 = vmatprep.subr.bf16.mxu0 0
    %655 = vmatpush1.bf16.msra.mxu0 %v632
    %656 = vmatprep.subr.bf16.mxu0 0
    %657 = vmatpush1.bf16.msra.mxu0 %v633
    %658 = vmatprep.subr.bf16.mxu0 0
    %659 = vmatpush1.bf16.msra.mxu0 0
    %660 = vmatprep.subr.bf16.mxu0 0
    %661 = vmatpush1.bf16.msra.mxu0 0
    %662 = vmatprep.subr.bf16.mxu0 0
    %663 = vmatpush1.bf16.msra.mxu0 0
    %664 = vmatprep.subr.bf16.mxu0 0
    %665 = vmatpush1.bf16.msra.mxu0 0
    %666 = vmatprep.subr.bf16.mxu0 0
    %667 = vmatpush1.bf16.msra.mxu0 0
    %668 = vmatprep.subr.bf16.mxu0 0
    %669 = vmatpush1.bf16.msra.mxu0 0
    %670 = vmatprep.subr.bf16.mxu0 0
    %671 = vmatpush1.bf16.msra.mxu0 0
    %672 = vmatprep.subr.bf16.mxu0 0
    %673 = vmatpush1.bf16.msra.mxu0 0
    %674 = vmatprep.mubr.bf16.mxu0 0
    %675 = vmatmul.mubr.bf16.gmra.mrb[0].mxu0 %v586
    %v676 = vpop.f32.mrb[0].mxu0
    %v677 = vadd.f32 %v592, %v676
    %v678 = vpop.f32.mrb[0].mxu0
    %v679 = vpop.f32.mrb[0].mxu0
    %v680 = vadd.f32 %v592, %v679
    %v681 = vpop.f32.mrb[0].mxu0
    %682 = vdwg.mxu0
    %v683 = vmax.f32 %v677, 0.0
    %v684 = vmax.f32 %v680, 0.0
    %v685 = vld [vmem:[#allocation15] sm:$0xf]
    %v686 = vld [vmem:[#allocation15 + $0x4] sm:$0xf]
    %v687 = vld [vmem:[#allocation15 + $0x8] sm:$0xf]
    %v688 = vld [vmem:[#allocation15 + $0xc] sm:$0xf]
    %v689 = vld [vmem:[#allocation15 + $0x10] sm:$0xf]
    %v690 = vld [vmem:[#allocation15 + $0x14] sm:$0xf]
    %v691 = vld [vmem:[#allocation15 + $0x18] sm:$0xf]
    %v692 = vld [vmem:[#allocation15 + $0x1c] sm:$0xf]
    %v693 = vld [vmem:[#allocation15 + $0x20] sm:$0xf]
    %v694 = vld [vmem:[#allocation15 + $0x24] sm:$0xf]
    %v695 = vld [vmem:[#allocation15 + $0x28] sm:$0xf]
    %v696 = vld [vmem:[#allocation15 + $0x2c] sm:$0xf]
    %v697 = vld [vmem:[#allocation15 + $0x30] sm:$0xf]
    %v698 = vld [vmem:[#allocation15 + $0x34] sm:$0xf]
    %v699 = vld [vmem:[#allocation15 + $0x38] sm:$0xf]
    %v700 = vld [vmem:[#allocation15 + $0x3c] sm:$0xf]
    %v701 = vpack.c.bf16 %v684, %v683
    %v702 = vld [vmem:[#allocation17] sm:$0x1]
    %v704 = vlaneseq
    %v705 = vshrl.u32 %v704, 7
    %v706 = vsub.s32 0, %v705
    %v707 = vrot.slane %v702, %v706
    %v725 = vunpack.c.l.b16 %v685
    %v726 = vunpack.c.l.b16 %v686
    %v727 = vunpack.c.l.b16 %v687
    %v728 = vunpack.c.l.b16 %v688
    %v729 = vunpack.c.l.b16 %v689
    %v730 = vunpack.c.l.b16 %v690
    %v731 = vunpack.c.l.b16 %v691
    %v732 = vunpack.c.l.b16 %v692
    %v733 = vunpack.c.l.b16 %v693
    %v734 = vunpack.c.l.b16 %v694
    %v735 = vunpack.c.l.b16 %v695
    %v736 = vunpack.c.l.b16 %v696
    %v737 = vunpack.c.l.b16 %v697
    %v738 = vunpack.c.l.b16 %v698
    %v739 = vunpack.c.l.b16 %v699
    %v740 = vunpack.c.l.b16 %v700
    %v741 = vpack.c.b16 %v726, %v725
    %v742 = vpack.c.b16 %v728, %v727
    %v743 = vpack.c.b16 %v730, %v729
    %v744 = vpack.c.b16 %v732, %v731
    %v745 = vpack.c.b16 %v734, %v733
    %v746 = vpack.c.b16 %v736, %v735
    %v747 = vpack.c.b16 %v738, %v737
    %v748 = vpack.c.b16 %v740, %v739
    %757 = vmatprep.subr.bf16.mxu0 0
    %758 = vmatpush1.bf16.msra.mxu0 %v741
    %759 = vmatprep.subr.bf16.mxu0 0
    %760 = vmatpush1.bf16.msra.mxu0 %v742
    %761 = vmatprep.subr.bf16.mxu0 0
    %762 = vmatpush1.bf16.msra.mxu0 %v743
    %763 = vmatprep.subr.bf16.mxu0 0
    %764 = vmatpush1.bf16.msra.mxu0 %v744
    %765 = vmatprep.subr.bf16.mxu0 0
    %766 = vmatpush1.bf16.msra.mxu0 %v745
    %767 = vmatprep.subr.bf16.mxu0 0
    %768 = vmatpush1.bf16.msra.mxu0 %v746
    %769 = vmatprep.subr.bf16.mxu0 0
    %770 = vmatpush1.bf16.msra.mxu0 %v747
    %771 = vmatprep.subr.bf16.mxu0 0
    %772 = vmatpush1.bf16.msra.mxu0 %v748
    %773 = vmatprep.subr.bf16.mxu0 0
    %774 = vmatpush1.bf16.msra.mxu0 0
    %775 = vmatprep.subr.bf16.mxu0 0
    %776 = vmatpush1.bf16.msra.mxu0 0
    %777 = vmatprep.subr.bf16.mxu0 0
    %778 = vmatpush1.bf16.msra.mxu0 0
    %779 = vmatprep.subr.bf16.mxu0 0
    %780 = vmatpush1.bf16.msra.mxu0 0
    %781 = vmatprep.subr.bf16.mxu0 0
    %782 = vmatpush1.bf16.msra.mxu0 0
    %783 = vmatprep.subr.bf16.mxu0 0
    %784 = vmatpush1.bf16.msra.mxu0 0
    %785 = vmatprep.subr.bf16.mxu0 0
    %786 = vmatpush1.bf16.msra.mxu0 0
    %787 = vmatprep.subr.bf16.mxu0 0
    %788 = vmatpush1.bf16.msra.mxu0 0
    %789 = vmatprep.mubr.bf16.mxu0 0
    %790 = vmatmul.mubr.bf16.gmra.mrb[0].mxu0 %v701
    %v791 = vpop.f32.mrb[0].mxu0
    %v792 = vadd.f32 %v707, %v791
    %v793 = vpop.f32.mrb[0].mxu0
    %v794 = vpop.f32.mrb[0].mxu0
    %v795 = vadd.f32 %v707, %v794
    %v796 = vpop.f32.mrb[0].mxu0
    %797 = vdwg.mxu0
    %v798 = vadd.f32 %v792, %v795
    %v799 = vrot.slane %v798, 4
    %v800 = vadd.f32 %v798, %v799
    %v801 = vrot.slane %v800, 2
    %v802 = vadd.f32 %v800, %v801
    %v803 = vrot.slane %v802, 1
    %v804 = vadd.f32 %v802, %v803
    %v805 = vmul.f32 %v792, %v792
    %v806 = vmul.f32 %v795, %v795
    %v807 = vadd.f32 %v805, %v806
    %v808 = vrot.slane %v807, 4
    %v809 = vadd.f32 %v807, %v808
    %v810 = vrot.slane %v809, 2
    %v811 = vadd.f32 %v809, %v810
    %v812 = vrot.slane %v811, 1
    %v813 = vadd.f32 %v811, %v812
    %v814 = vmul.f32 %v804, 0.0625
    %v815 = vmul.f32 %v813, 0.0625
    %v816 = vmul.f32 %v814, %v814
    %v817 = vsub.f32 %v815, %v816
    %v818 = vmax.f32 %v817, 0.0
    %v819 = vsub.f32 %v792, %v814
    %v820 = vsub.f32 %v795, %v814
    %v821 = vadd.f32 %v818, 1e-05
    %v822 = vrsqrt.pop %v821
    %v823 = vmul.f32 %v819, %v822
    %v824 = vmul.f32 %v820, %v822
    %v825 = vld [vmem:[#allocation18] sm:$0x1]
    %v827 = vlaneseq
    %v828 = vshrl.u32 %v827, 7
    %v829 = vsub.s32 0, %v828
    %v830 = vrot.slane %v825, %v829
    %v832 = vmul.f32 %v823, %v830
    %v833 = vmul.f32 %v824, %v830
    %v834 = vld [vmem:[#allocation20] sm:$0x1]
    %v836 = vlaneseq
    %v837 = vshrl.u32 %v836, 7
    %v838 = vsub.s32 0, %v837
    %v839 = vrot.slane %v834, %v838
    %v841 = vadd.f32 %v832, %v839
    %v842 = vadd.f32 %v833, %v839
    %v843 = vld [vmem:[%s13] sm:$0x3]
    %vm844 = vcmask 123904
    %v845 = vsel %vm844, %v843, 0.0
    %846 = vadd.xlane.f32.xlu0 %v845
    %v847 = vpop.xlane.xlu0 %846
    %vm848 = vcmp.gt.f32.partialorder %v847, 0.0
    %v849 = vmax.f32 %v847, 1.0
    %v850 = vpack.c.bf16 %v843, %v843
    %v851 = vpack.c.bf16 %v842, %v841
    %v853 = vsel %vm247, %v850, 0
    %855 = vmatprep.subr.bf16.mxu0 0
    %856 = vmatpush1.bf16.msra.mxu0 %v851
    %857 = vmatprep.subr.bf16.mxu0 0
    %858 = vmatpush1.bf16.msra.mxu0 0
    %859 = vmatprep.subr.bf16.mxu0 0
    %860 = vmatpush1.bf16.msra.mxu0 0
    %861 = vmatprep.subr.bf16.mxu0 0
    %862 = vmatpush1.bf16.msra.mxu0 0
    %863 = vmatprep.subr.bf16.mxu0 0
    %864 = vmatpush1.bf16.msra.mxu0 0
    %865 = vmatprep.subr.bf16.mxu0 0
    %866 = vmatpush1.bf16.msra.mxu0 0
    %867 = vmatprep.subr.bf16.mxu0 0
    %868 = vmatpush1.bf16.msra.mxu0 0
    %869 = vmatprep.subr.bf16.mxu0 0
    %870 = vmatpush1.bf16.msra.mxu0 0
    %871 = vmatprep.subr.bf16.mxu0 0
    %872 = vmatpush1.bf16.msra.mxu0 0
    %873 = vmatprep.subr.bf16.mxu0 0
    %874 = vmatpush1.bf16.msra.mxu0 0
    %875 = vmatprep.subr.bf16.mxu0 0
    %876 = vmatpush1.bf16.msra.mxu0 0
    %877 = vmatprep.subr.bf16.mxu0 0
    %878 = vmatpush1.bf16.msra.mxu0 0
    %879 = vmatprep.subr.bf16.mxu0 0
    %880 = vmatpush1.bf16.msra.mxu0 0
    %881 = vmatprep.subr.bf16.mxu0 0
    %882 = vmatpush1.bf16.msra.mxu0 0
    %883 = vmatprep.subr.bf16.mxu0 0
    %884 = vmatpush1.bf16.msra.mxu0 0
    %885 = vmatprep.subr.bf16.mxu0 0
    %886 = vmatpush1.bf16.msra.mxu0 0
    %887 = vmatprep.mubr.bf16.mxu0 0
    %888 = vmatmul.mubr.bf16.gmra.mrb[0].mxu0 %v853
    %v889 = vpop.f32.mrb[0].mxu0
    %v890 = vadd.f32 0.0, %v889
    %v891 = vpop.f32.mrb[0].mxu0
    %v892 = vpop.f32.mrb[0].mxu0
    %v893 = vpop.f32.mrb[0].mxu0
    %894 = vdwg.mxu0
    %v895 = vrcp.pop %v849
    %v896 = vmul.f32 %v890, %v895
    %v897 = vld [vmem:[%s14] sm:$0xff]
    %v898 = vld [vmem:[%s14 + $0x8] sm:$0xff]
    %v899 = vsub.f32 %v897, 1.0
    %v900 = vsub.f32 %v898, 1.0
    %v901 = vmul.f32 %v899, 1e+30
    %v902 = vmul.f32 %v900, 1e+30
    %904 = vset.pattern.permute.xlu0 0
    %905 = vperm.xlu0 %904, %v901
    %v906 = vpop.permute.xlu0 %905
    %909 = vset.pattern.permute.xlu0 0
    %910 = vperm.xlu0 %909, %v902
    %v911 = vpop.permute.xlu0 %910
    %v913 = vadd.f32 %v841, %v906
    %v914 = vadd.f32 %v842, %v911
    %v915 = vmax.f32 %v913, %v914
    %v916 = vrot.slane %v915, 4
    %v917 = vmax.f32 %v915, %v916
    %v918 = vrot.slane %v917, 2
    %v919 = vmax.f32 %v917, %v918
    %v920 = vrot.slane %v919, 1
    %v921 = vmax.f32 %v919, %v920
    %922 = vset.pattern.permute.xlu0 1
    %923 = vperm.xlu0 %922, %v901
    %v924 = vpop.permute.xlu0 %923
    %926 = vset.pattern.permute.xlu0 1
    %927 = vperm.xlu0 %926, %v902
    %v928 = vpop.permute.xlu0 %927
    %v930 = vadd.f32 %v841, %v924
    %v931 = vadd.f32 %v842, %v928
    %v932 = vmax.f32 %v930, %v931
    %v933 = vrot.slane %v932, 4
    %v934 = vmax.f32 %v932, %v933
    %v935 = vrot.slane %v934, 2
    %v936 = vmax.f32 %v934, %v935
    %v937 = vrot.slane %v936, 1
    %v938 = vmax.f32 %v936, %v937
    %vm939 = vcmask 1040384
    %v940 = vsel %vm939, %v921, %v938
    %v941 = vsel %vm848, 1, 0
    %vm942 = vcmp.eq.s32.totalorder %v941, 1
    %v943 = vsel %vm942, %v940, 0.0
    %v944 = vsel %vm942, %v896, 0.0
    %v945 = vld [vmem:[%s15] sm:$0xf]
    %v946 = vld [vmem:[%s15 + $0x4] sm:$0xf]
    %v947 = vld [vmem:[%s15 + $0x8] sm:$0xf]
    %v948 = vld [vmem:[%s15 + $0xc] sm:$0xf]
    %v949 = vld [vmem:[%s15 + $0x10] sm:$0xf]
    %v950 = vld [vmem:[%s15 + $0x14] sm:$0xf]
    %v951 = vld [vmem:[%s15 + $0x18] sm:$0xf]
    %v952 = vld [vmem:[%s15 + $0x1c] sm:$0xf]
    %v953 = vld [vmem:[%s15 + $0x20] sm:$0xf]
    %v954 = vld [vmem:[%s15 + $0x24] sm:$0xf]
    %v955 = vld [vmem:[%s15 + $0x28] sm:$0xf]
    %v956 = vld [vmem:[%s15 + $0x2c] sm:$0xf]
    %v957 = vld [vmem:[%s15 + $0x30] sm:$0xf]
    %v958 = vld [vmem:[%s15 + $0x34] sm:$0xf]
    %v959 = vld [vmem:[%s15 + $0x38] sm:$0xf]
    %v960 = vld [vmem:[%s15 + $0x3c] sm:$0xf]
    %v961 = vpack.c.bf16 %v943, %v943
    %v962 = vld [vmem:[#allocation21] sm:$0xf]
    %v963 = vld [vmem:[#allocation21 + $0x4] sm:$0xf]
    %v964 = vld [vmem:[#allocation21 + $0x8] sm:$0xf]
    %v965 = vld [vmem:[#allocation21 + $0xc] sm:$0xf]
    %v966 = vld [vmem:[#allocation21 + $0x10] sm:$0xf]
    %v967 = vld [vmem:[#allocation21 + $0x14] sm:$0xf]
    %v968 = vld [vmem:[#allocation21 + $0x18] sm:$0xf]
    %v969 = vld [vmem:[#allocation21 + $0x1c] sm:$0xf]
    %v970 = vld [vmem:[#allocation21 + $0x20] sm:$0xf]
    %v971 = vld [vmem:[#allocation21 + $0x24] sm:$0xf]
    %v972 = vld [vmem:[#allocation21 + $0x28] sm:$0xf]
    %v973 = vld [vmem:[#allocation21 + $0x2c] sm:$0xf]
    %v974 = vld [vmem:[#allocation21 + $0x30] sm:$0xf]
    %v975 = vld [vmem:[#allocation21 + $0x34] sm:$0xf]
    %v976 = vld [vmem:[#allocation21 + $0x38] sm:$0xf]
    %v977 = vld [vmem:[#allocation21 + $0x3c] sm:$0xf]
    %v978 = vpack.c.bf16 %v944, %v944
    %v995 = vunpack.c.l.b16 %v962
    %v996 = vunpack.c.l.b16 %v963
    %v997 = vunpack.c.l.b16 %v964
    %v998 = vunpack.c.l.b16 %v965
    %v999 = vunpack.c.l.b16 %v966
    %v1000 = vunpack.c.l.b16 %v967
    %v1001 = vunpack.c.l.b16 %v968
    %v1002 = vunpack.c.l.b16 %v969
    %v1003 = vunpack.c.l.b16 %v970
    %v1004 = vunpack.c.l.b16 %v971
    %v1005 = vunpack.c.l.b16 %v972
    %v1006 = vunpack.c.l.b16 %v973
    %v1007 = vunpack.c.l.b16 %v974
    %v1008 = vunpack.c.l.b16 %v975
    %v1009 = vunpack.c.l.b16 %v976
    %v1010 = vunpack.c.l.b16 %v977
    %v1011 = vpack.c.b16 %v996, %v995
    %v1012 = vpack.c.b16 %v998, %v997
    %v1013 = vpack.c.b16 %v1000, %v999
    %v1014 = vpack.c.b16 %v1002, %v1001
    %v1015 = vpack.c.b16 %v1004, %v1003
    %v1016 = vpack.c.b16 %v1006, %v1005
    %v1017 = vpack.c.b16 %v1008, %v1007
    %v1018 = vpack.c.b16 %v1010, %v1009
    %1027 = vmatprep.subr.bf16.mxu0 0
    %1028 = vmatpush1.bf16.msra.mxu0 %v1011
    %1029 = vmatprep.subr.bf16.mxu0 0
    %1030 = vmatpush1.bf16.msra.mxu0 %v1012
    %1031 = vmatprep.subr.bf16.mxu0 0
    %1032 = vmatpush1.bf16.msra.mxu0 %v1013
    %1033 = vmatprep.subr.bf16.mxu0 0
    %1034 = vmatpush1.bf16.msra.mxu0 %v1014
    %1035 = vmatprep.subr.bf16.mxu0 0
    %1036 = vmatpush1.bf16.msra.mxu0 %v1015
    %1037 = vmatprep.subr.bf16.mxu0 0
    %1038 = vmatpush1.bf16.msra.mxu0 %v1016
    %1039 = vmatprep.subr.bf16.mxu0 0
    %1040 = vmatpush1.bf16.msra.mxu0 %v1017
    %1041 = vmatprep.subr.bf16.mxu0 0
    %1042 = vmatpush1.bf16.msra.mxu0 %v1018
    %1043 = vmatprep.subr.bf16.mxu0 0
    %1044 = vmatpush1.bf16.msra.mxu0 0
    %1045 = vmatprep.subr.bf16.mxu0 0
    %1046 = vmatpush1.bf16.msra.mxu0 0
    %1047 = vmatprep.subr.bf16.mxu0 0
    %1048 = vmatpush1.bf16.msra.mxu0 0
    %1049 = vmatprep.subr.bf16.mxu0 0
    %1050 = vmatpush1.bf16.msra.mxu0 0
    %1051 = vmatprep.subr.bf16.mxu0 0
    %1052 = vmatpush1.bf16.msra.mxu0 0
    %1053 = vmatprep.subr.bf16.mxu0 0
    %1054 = vmatpush1.bf16.msra.mxu0 0
    %1055 = vmatprep.subr.bf16.mxu0 0
    %1056 = vmatpush1.bf16.msra.mxu0 0
    %1057 = vmatprep.subr.bf16.mxu0 0
    %1058 = vmatpush1.bf16.msra.mxu0 0
    %1059 = vmatprep.mubr.bf16.mxu0 0
    %1060 = vmatmul.mubr.bf16.gmra.mrb[0].mxu0 %v978
    %v1061 = vpop.f32.mrb[0].mxu0
    %v1062 = vadd.f32 0.0, %v1061
    %v1063 = vpop.f32.mrb[0].mxu0
    %v1064 = vpop.f32.mrb[0].mxu0
    %v1065 = vpop.f32.mrb[0].mxu0
    %1066 = vdwg.mxu0
    %v1083 = vunpack.c.l.b16 %v945
    %v1084 = vunpack.c.l.b16 %v946
    %v1085 = vunpack.c.l.b16 %v947
    %v1086 = vunpack.c.l.b16 %v948
    %v1087 = vunpack.c.l.b16 %v949
    %v1088 = vunpack.c.l.b16 %v950
    %v1089 = vunpack.c.l.b16 %v951
    %v1090 = vunpack.c.l.b16 %v952
    %v1091 = vunpack.c.l.b16 %v953
    %v1092 = vunpack.c.l.b16 %v954
    %v1093 = vunpack.c.l.b16 %v955
    %v1094 = vunpack.c.l.b16 %v956
    %v1095 = vunpack.c.l.b16 %v957
    %v1096 = vunpack.c.l.b16 %v958
    %v1097 = vunpack.c.l.b16 %v959
    %v1098 = vunpack.c.l.b16 %v960
    %v1099 = vpack.c.b16 %v1084, %v1083
    %v1100 = vpack.c.b16 %v1086, %v1085
    %v1101 = vpack.c.b16 %v1088, %v1087
    %v1102 = vpack.c.b16 %v1090, %v1089
    %v1103 = vpack.c.b16 %v1092, %v1091
    %v1104 = vpack.c.b16 %v1094, %v1093
    %v1105 = vpack.c.b16 %v1096, %v1095
    %v1106 = vpack.c.b16 %v1098, %v1097
    %1115 = vmatprep.subr.bf16.mxu0 0
    %1116 = vmatpush1.bf16.msra.mxu0 %v1099
    %1117 = vmatprep.subr.bf16.mxu0 0
    %1118 = vmatpush1.bf16.msra.mxu0 %v1100
    %1119 = vmatprep.subr.bf16.mxu0 0
    %1120 = vmatpush1.bf16.msra.mxu0 %v1101
    %1121 = vmatprep.subr.bf16.mxu0 0
    %1122 = vmatpush1.bf16.msra.mxu0 %v1102
    %1123 = vmatprep.subr.bf16.mxu0 0
    %1124 = vmatpush1.bf16.msra.mxu0 %v1103
    %1125 = vmatprep.subr.bf16.mxu0 0
    %1126 = vmatpush1.bf16.msra.mxu0 %v1104
    %1127 = vmatprep.subr.bf16.mxu0 0
    %1128 = vmatpush1.bf16.msra.mxu0 %v1105
    %1129 = vmatprep.subr.bf16.mxu0 0
    %1130 = vmatpush1.bf16.msra.mxu0 %v1106
    %1131 = vmatprep.subr.bf16.mxu0 0
    %1132 = vmatpush1.bf16.msra.mxu0 0
    %1133 = vmatprep.subr.bf16.mxu0 0
    %1134 = vmatpush1.bf16.msra.mxu0 0
    %1135 = vmatprep.subr.bf16.mxu0 0
    %1136 = vmatpush1.bf16.msra.mxu0 0
    %1137 = vmatprep.subr.bf16.mxu0 0
    %1138 = vmatpush1.bf16.msra.mxu0 0
    %1139 = vmatprep.subr.bf16.mxu0 0
    %1140 = vmatpush1.bf16.msra.mxu0 0
    %1141 = vmatprep.subr.bf16.mxu0 0
    %1142 = vmatpush1.bf16.msra.mxu0 0
    %1143 = vmatprep.subr.bf16.mxu0 0
    %1144 = vmatpush1.bf16.msra.mxu0 0
    %1145 = vmatprep.subr.bf16.mxu0 0
    %1146 = vmatpush1.bf16.msra.mxu0 0
    %1147 = vmatprep.mubr.bf16.mxu0 0
    %1148 = vmatmul.mubr.bf16.gmra.mrb[0].mxu0 %v961
    %v1149 = vpop.f32.mrb[0].mxu0
    %v1150 = vadd.f32 %v1062, %v1149
    %v1151 = vpop.f32.mrb[0].mxu0
    %v1152 = vpop.f32.mrb[0].mxu0
    %v1153 = vpop.f32.mrb[0].mxu0
    %1154 = vdwg.mxu0
    %v1155 = vld [vmem:[%s17] sm:$0x1]
    %v1157 = vlaneseq
    %v1158 = vshrl.u32 %v1157, 7
    %v1159 = vsub.s32 0, %v1158
    %v1160 = vrot.slane %v1155, %v1159
    %v1162 = vadd.f32 %v1150, %v1160
    %v1163 = vmax.f32 %v1162, 0.0
    %v1164 = vld [vmem:[#allocation23] sm:$0xf]
    %v1165 = vld [vmem:[#allocation23 + $0x4] sm:$0xf]
    %v1166 = vld [vmem:[#allocation23 + $0x8] sm:$0xf]
    %v1167 = vld [vmem:[#allocation23 + $0xc] sm:$0xf]
    %v1168 = vld [vmem:[#allocation23 + $0x10] sm:$0xf]
    %v1169 = vld [vmem:[#allocation23 + $0x14] sm:$0xf]
    %v1170 = vld [vmem:[#allocation23 + $0x18] sm:$0xf]
    %v1171 = vld [vmem:[#allocation23 + $0x1c] sm:$0xf]
    %v1172 = vld [vmem:[#allocation23 + $0x20] sm:$0xf]
    %v1173 = vld [vmem:[#allocation23 + $0x24] sm:$0xf]
    %v1174 = vld [vmem:[#allocation23 + $0x28] sm:$0xf]
    %v1175 = vld [vmem:[#allocation23 + $0x2c] sm:$0xf]
    %v1176 = vld [vmem:[#allocation23 + $0x30] sm:$0xf]
    %v1177 = vld [vmem:[#allocation23 + $0x34] sm:$0xf]
    %v1178 = vld [vmem:[#allocation23 + $0x38] sm:$0xf]
    %v1179 = vld [vmem:[#allocation23 + $0x3c] sm:$0xf]
    %v1180 = vpack.c.bf16 %v1163, %v1163
    %v1181 = vld [vmem:[%s19] sm:$0x1]
    %v1183 = vlaneseq
    %v1184 = vshrl.u32 %v1183, 7
    %v1185 = vsub.s32 0, %v1184
    %v1186 = vrot.slane %v1181, %v1185
    %v1204 = vunpack.c.l.b16 %v1164
    %v1205 = vunpack.c.l.b16 %v1165
    %v1206 = vunpack.c.l.b16 %v1166
    %v1207 = vunpack.c.l.b16 %v1167
    %v1208 = vunpack.c.l.b16 %v1168
    %v1209 = vunpack.c.l.b16 %v1169
    %v1210 = vunpack.c.l.b16 %v1170
    %v1211 = vunpack.c.l.b16 %v1171
    %v1212 = vunpack.c.l.b16 %v1172
    %v1213 = vunpack.c.l.b16 %v1173
    %v1214 = vunpack.c.l.b16 %v1174
    %v1215 = vunpack.c.l.b16 %v1175
    %v1216 = vunpack.c.l.b16 %v1176
    %v1217 = vunpack.c.l.b16 %v1177
    %v1218 = vunpack.c.l.b16 %v1178
    %v1219 = vunpack.c.l.b16 %v1179
    %v1220 = vpack.c.b16 %v1205, %v1204
    %v1221 = vpack.c.b16 %v1207, %v1206
    %v1222 = vpack.c.b16 %v1209, %v1208
    %v1223 = vpack.c.b16 %v1211, %v1210
    %v1224 = vpack.c.b16 %v1213, %v1212
    %v1225 = vpack.c.b16 %v1215, %v1214
    %v1226 = vpack.c.b16 %v1217, %v1216
    %v1227 = vpack.c.b16 %v1219, %v1218
    %1236 = vmatprep.subr.bf16.mxu0 0
    %1237 = vmatpush1.bf16.msra.mxu0 %v1220
    %1238 = vmatprep.subr.bf16.mxu0 0
    %1239 = vmatpush1.bf16.msra.mxu0 %v1221
    %1240 = vmatprep.subr.bf16.mxu0 0
    %1241 = vmatpush1.bf16.msra.mxu0 %v1222
    %1242 = vmatprep.subr.bf16.mxu0 0
    %1243 = vmatpush1.bf16.msra.mxu0 %v1223
    %1244 = vmatprep.subr.bf16.mxu0 0
    %1245 = vmatpush1.bf16.msra.mxu0 %v1224
    %1246 = vmatprep.subr.bf16.mxu0 0
    %1247 = vmatpush1.bf16.msra.mxu0 %v1225
    %1248 = vmatprep.subr.bf16.mxu0 0
    %1249 = vmatpush1.bf16.msra.mxu0 %v1226
    %1250 = vmatprep.subr.bf16.mxu0 0
    %1251 = vmatpush1.bf16.msra.mxu0 %v1227
    %1252 = vmatprep.subr.bf16.mxu0 0
    %1253 = vmatpush1.bf16.msra.mxu0 0
    %1254 = vmatprep.subr.bf16.mxu0 0
    %1255 = vmatpush1.bf16.msra.mxu0 0
    %1256 = vmatprep.subr.bf16.mxu0 0
    %1257 = vmatpush1.bf16.msra.mxu0 0
    %1258 = vmatprep.subr.bf16.mxu0 0
    %1259 = vmatpush1.bf16.msra.mxu0 0
    %1260 = vmatprep.subr.bf16.mxu0 0
    %1261 = vmatpush1.bf16.msra.mxu0 0
    %1262 = vmatprep.subr.bf16.mxu0 0
    %1263 = vmatpush1.bf16.msra.mxu0 0
    %1264 = vmatprep.subr.bf16.mxu0 0
    %1265 = vmatpush1.bf16.msra.mxu0 0
    %1266 = vmatprep.subr.bf16.mxu0 0
    %1267 = vmatpush1.bf16.msra.mxu0 0
    %1268 = vmatprep.mubr.bf16.mxu0 0
    %1269 = vmatmul.mubr.bf16.gmra.mrb[0].mxu0 %v1180
    %v1270 = vpop.f32.mrb[0].mxu0
    %v1271 = vadd.f32 %v1186, %v1270
    %v1272 = vpop.f32.mrb[0].mxu0
    %v1273 = vpop.f32.mrb[0].mxu0
    %v1274 = vpop.f32.mrb[0].mxu0
    %1275 = vdwg.mxu0
    %1276 = vst [vmem:[#allocation24] sm:$0x3] %v1271
    // Predicated region
    $region134: #{tpu_custom_call.1} parent=1 // pred_check
      _
    $region135: #{tpu_custom_call.1} parent=1 // pred_check_branch
      %1278 = sbr.rel (0) target = $region137
    $region136: #{tpu_custom_call.1} parent=1 // pred_region
      %s1280 = ssub.s32 32, 32
      %1281 = vsyncadd [#allocation5], %s1280
      %s1283 = sshll.u32 [#allocation24], 4
      %s1284 = int_to_ptr.vmem [resolvable:$true] %s1283
      %1286 = dma.vmem_to_hbm [thread:$0]  %s1284, 32, %s20, [#allocation5]
    $region137: #{tpu_custom_call.1} parent=1 // pred_fallthru
      _
    // Predicated region
    $region138: #{tpu_custom_call.1} parent=1 // pred_check
      _
    $region139: #{tpu_custom_call.1} parent=1 // pred_check_branch
      %1288 = sbr.rel (0) target = $region141
    $region140: #{tpu_custom_call.1} parent=1 // pred_region
      %1289 = dma.done [#allocation5], 32
    $region141: #{tpu_custom_call.1} parent=1 // pred_fallthru
      _
    %1290 = vsyncpa [#allocation4], 1
    %1291 = vsyncpa [#allocation7], 1
    %1292 = vsyncpa [#allocation10], 1
    %1293 = vsyncpa [#allocation13], 1
    %1294 = vsyncpa [#allocation16], 1
    %1295 = vsyncpa [#allocation19], 1
    %1296 = vsyncpa [#allocation22], 1
    %1297 = vsyncpa [#allocation5], 1

</llo_original>
